<compile_context>
chip_gen: v7x
topology: tpu7x:2x2x1
jax: 0.10.0
libtpu: 0.0.40
codegen_flags: <defaults>
</compile_context>

<pallas_src>
import functools

import jax
import jax.numpy as jnp
from jax import lax
from jax.experimental import pallas as pl
from jax.experimental.pallas import tpu as pltpu

# Zero columns on each side of W inside the padded scratch. 8 keeps the
# sublane-axis (W) slices / stores tile-aligned whenever W % 8 == 0.
_WPAD = 8


def _arm_kernel(x_ref, w3_ref, b1_ref, w1_ref, b2_ref, out_ref, pad_ref, *,
                row_tile):
    """One batch element per grid step.

    x_ref   : (1, H, W, Cin)        bf16  NHWC input tile (pre-cast in wrapper)
    w3_ref  : (3, 3*Cin, Cout)      bf16  3x3 weights, BN1 scale folded in,
                                          axis0 = ky, K ordered (kx, cin)
    b1_ref  : (1, Cout)             f32   folded BN1 bias
    w1_ref  : (Cout, Cout)          f32   1x1 weights (in, out), BN2 scale folded
    b2_ref  : (1, Cout)             f32   folded BN2 bias
    out_ref : (1, H, W, Cout)       f32
    pad_ref : (H+2, W+2*_WPAD, Cin) bf16  persistent zero-bordered scratch
    """
    h = out_ref.shape[1]
    w = out_ref.shape[2]
    cin = x_ref.shape[3]
    cout = out_ref.shape[3]
    wp = pad_ref.shape[1]

    # ---- stage the input into the zero-bordered padded scratch -------------
    # The border is re-zeroed every step (cheap; robust even if the batch axis
    # is split across TensorCores).  The interior store never dirties it.
    pad_ref[0:1, :, :] = jnp.zeros((1, wp, cin), jnp.bfloat16)
    pad_ref[h + 1:h + 2, :, :] = jnp.zeros((1, wp, cin), jnp.bfloat16)
    pad_ref[:, 0:_WPAD, :] = jnp.zeros((h + 2, _WPAD, cin), jnp.bfloat16)
    pad_ref[:, _WPAD + w:_WPAD + w + _WPAD, :] = jnp.zeros(
        (h + 2, _WPAD, cin), jnp.bfloat16)
    pad_ref[1:h + 1, _WPAD:_WPAD + w, :] = x_ref[0]

    b1 = b1_ref[...]                                    # hoisted (1, Cout) f32
    n_tiles = h // row_tile

    # ---- 3x3 conv: row-tiled, K=3*Cin matmuls accumulated over ky ----------
    def tile_body(t, psum):
        r0 = pl.multiple_of(t * row_tile, row_tile)
        rows = pad_ref[pl.ds(r0, row_tile + 2), :, :]   # (th+2, Wp, Cin) bf16
        # 3 kx-shifted windows lane-concatenated -> K = 3*Cin (no 9x patch).
        xk = jnp.concatenate(
            [rows[:, _WPAD - 1 + kx:_WPAD - 1 + kx + w, :] for kx in range(3)],
            axis=-1)                                    # (th+2, W, 3*Cin)
        acc = jnp.zeros((row_tile * w, cout), jnp.float32)
        for ky in range(3):                             # 3 MXU matmuls, f32 acc
            lhs = xk[ky:ky + row_tile].reshape(row_tile * w, 3 * cin)
            acc = acc + jnp.dot(lhs, w3_ref[ky],
                                preferred_element_type=jnp.float32)
        feat = jnp.maximum(acc + b1, 0.0)               # BN1 scale already in w3
        # Stage feat straight into the VMEM-resident output block.
        out_ref[:, pl.ds(r0, row_tile), :, :] = feat.reshape(
            1, row_tile, w, cout)
        return psum + jnp.sum(feat, axis=0, keepdims=True)

    psum = lax.fori_loop(0, n_tiles, tile_body,
                         jnp.zeros((1, cout), jnp.float32))

    # ---- attention branch: global avg pool -> 1x1 conv -> BN -> sigmoid ----
    mean = psum * (1.0 / (h * w))                       # (1, Cout) f32
    att = jnp.dot(mean, w1_ref[...], preferred_element_type=jnp.float32)
    att = jax.nn.sigmoid(att + b2_ref[...])             # BN2 scale folded in w1

    # ---- fused epilogue: rescale the staged feat in place ------------------
    out_ref[...] = out_ref[...] * att.reshape(1, 1, 1, cout)


@functools.partial(jax.jit, static_argnames=("row_tile",))
def attention_refinement_module(x_nchw, w3, w1, bn1, bn2, row_tile=None):
    """x_nchw: (N, Cin, H, W) f32.
    w3: (Cout, Cin, 3, 3) PyTorch-layout 3x3 conv weight (no bias).
    w1: (Cout, Cout, 1, 1) PyTorch-layout 1x1 conv weight (no bias).
    bn1/bn2: dicts with gamma, beta, mean, var (each (Cout,)), inference mode.
    Returns (N, Cout, H, W) f32.
    """
    n, cin, h, w = x_nchw.shape
    cout = w3.shape[0]
    eps = 1e-5

    if row_tile is None:
        # Largest divisor of H whose per-tile temporaries (xk bf16 + acc/feat
        # f32) fit ~8 MiB -> large, MXU-friendly M = row_tile*W, exact trip
        # count for the fori_loop.
        budget = 8 * 1024 * 1024
        row_tile = 1
        for cand in range(h, 0, -1):
            if h % cand:
                continue
            tile_bytes = ((cand + 2) * w * 3 * cin * 2
                          + 2 * cand * w * cout * 4)
            if tile_bytes <= budget:
                row_tile = cand
                break
    if h % row_tile != 0:
        raise ValueError(f"row_tile={row_tile} must divide H={h}")

    # Fold inference-mode BatchNorm into per-channel scale / bias; the scale is
    # folded into the conv weights so the kernel epilogue is bias + ReLU only.
    def fold(bn):
        scale = bn["gamma"].astype(jnp.float32) / jnp.sqrt(
            bn["var"].astype(jnp.float32) + eps)
        bias = (bn["beta"].astype(jnp.float32)
                - bn["mean"].astype(jnp.float32) * scale)
        return scale, bias

    s1, b1 = fold(bn1)
    s2, b2 = fold(bn2)

    # NCHW -> NHWC, bf16 at the kernel boundary (halves x DMA bytes; the MXU
    # path rounds to bf16 anyway).
    x_nhwc = jnp.transpose(x_nchw, (0, 2, 3, 1)).astype(jnp.bfloat16)

    # (Cout, Cin, 3, 3) -> (ky, kx, Cin, Cout) -> (3, 3*Cin, Cout); BN1 scale
    # folded per output channel in f32, rounded once to bf16 for the MXU.
    w3_k = jnp.transpose(w3, (2, 3, 1, 0)).reshape(3, 3 * cin, cout)
    w3_k = (w3_k * s1.reshape(1, 1, cout)).astype(jnp.bfloat16)
    # (Cout, Cout, 1, 1) -> (in, out) with BN2 scale folded; tiny, keep f32.
    w1_k = (w1.reshape(cout, cout).T * s2.reshape(1, cout)).astype(jnp.float32)

    b1 = b1.reshape(1, cout)
    b2 = b2.reshape(1, cout)

    wp = w + 2 * _WPAD
    # Explicit scoped-VMEM budget from the actual block / scratch / temp sizes.
    est = (2 * h * w * cin * 2                 # double-buffered x block (bf16)
           + 2 * h * w * cout * 4              # double-buffered out block (f32)
           + (h + 2) * wp * cin * 2            # padded scratch (bf16)
           + 3 * 3 * cin * cout * 2            # w3 (bf16)
           + cout * cout * 4 + 2 * cout * 4    # w1 + biases (f32)
           + (row_tile + 2) * w * 3 * cin * 2  # xk temporary (bf16)
           + 2 * row_tile * w * cout * 4)      # acc + feat (f32)
    vmem_limit = int(min(100 * 1024 * 1024, max(32 * 1024 * 1024, 2 * est)))

    kernel = functools.partial(_arm_kernel, row_tile=row_tile)

    out_nhwc = pl.pallas_call(
        kernel,
        out_shape=jax.ShapeDtypeStruct((n, h, w, cout), jnp.float32),
        grid_spec=pltpu.PrefetchScalarGridSpec(
            num_scalar_prefetch=0,
            grid=(n,),
            in_specs=[
                pl.BlockSpec((1, h, w, cin), lambda b: (b, 0, 0, 0)),
                # Constant index maps: weights / bias vectors stay
                # VMEM-resident across batch steps (no per-step re-DMA).
                pl.BlockSpec((3, 3 * cin, cout), lambda b: (0, 0, 0)),
                pl.BlockSpec((1, cout), lambda b: (0, 0)),
                pl.BlockSpec((cout, cout), lambda b: (0, 0)),
                pl.BlockSpec((1, cout), lambda b: (0, 0)),
            ],
            out_specs=pl.BlockSpec((1, h, w, cout), lambda b: (b, 0, 0, 0)),
            scratch_shapes=[
                pltpu.VMEM((h + 2, wp, cin), jnp.bfloat16),
            ],
        ),
        compiler_params=pltpu.CompilerParams(
            # Batch axis across TensorCores (megacore) when N >= 2.
            dimension_semantics=("parallel",),
            vmem_limit_bytes=vmem_limit,
        ),
    )(x_nhwc, w3_k, b1, w1_k, b2)

    # TODO(synk): if the consumer accepts NHWC (and/or bf16) output, skip this
    # transpose / keep out_shape bf16 to halve output HBM traffic.
    return jnp.transpose(out_nhwc, (0, 3, 1, 2))


def _reference(x_nchw, w3, w1, bn1, bn2):
    """Pure-JAX reference mirroring the PyTorch forward (inference-mode BN).

    Mirrors the kernel's MXU numerics: x and the scale-folded 3x3 weights are
    rounded to bf16 (products then exact), accumulation stays f32."""
    eps = 1e-5
    cout = w3.shape[0]

    def fold(bn):
        scale = bn["gamma"] / jnp.sqrt(bn["var"] + eps)
        bias = bn["beta"] - bn["mean"] * scale
        return scale, bias

    s1, b1 = fold(bn1)
    s2, b2 = fold(bn2)

    xq = x_nchw.astype(jnp.bfloat16).astype(jnp.float32)
    w3f = (w3 * s1[:, None, None, None]).astype(jnp.bfloat16).astype(jnp.float32)
    dn = lax.conv_dimension_numbers(xq.shape, w3f.shape,
                                    ("NCHW", "OIHW", "NCHW"))
    feat = lax.conv_general_dilated(
        xq, w3f, (1, 1), ((1, 1), (1, 1)), dimension_numbers=dn,
        precision=lax.Precision.HIGHEST, preferred_element_type=jnp.float32)
    feat = jax.nn.relu(feat + b1.reshape(1, -1, 1, 1))

    atten = jnp.mean(feat, axis=(2, 3), keepdims=True)            # (N,C,1,1)
    w1f = w1.reshape(cout, cout) * s2[:, None]                     # (out, in)
    atten = jnp.einsum("nchw,oc->nohw", atten, w1f,
                       precision=lax.Precision.HIGHEST)
    atten = jax.nn.sigmoid(atten + b2.reshape(1, -1, 1, 1))
    return feat * atten


if __name__ == "__main__":
    key = jax.random.PRNGKey(0)
    k_x, k_w3, k_w1, k_g1, k_b1, k_m1, k_g2, k_b2, k_m2 = jax.random.split(key, 9)

    N, C_IN, C_OUT, H, W = 2, 4, 8, 16, 16

    x = jax.random.normal(k_x, (N, C_IN, H, W), jnp.float32)

    # kaiming_normal_(a=1): gain = sqrt(2/(1+1^2)) = 1, std = 1/sqrt(fan_in)
    std3 = 1.0 / jnp.sqrt(jnp.float32(C_IN * 3 * 3))
    w3 = jax.random.normal(k_w3, (C_OUT, C_IN, 3, 3), jnp.float32) * std3
    std1 = 1.0 / jnp.sqrt(jnp.float32(C_OUT * 1 * 1))
    w1 = jax.random.normal(k_w1, (C_OUT, C_OUT, 1, 1), jnp.float32) * std1

    # Deterministic, non-trivial BatchNorm parameters (inference mode).
    bn1 = dict(gamma=1.0 + 0.1 * jax.random.normal(k_g1, (C_OUT,)),
               beta=0.1 * jax.random.normal(k_b1, (C_OUT,)),
               mean=0.1 * jax.random.normal(k_m1, (C_OUT,)),
               var=jnp.abs(1.0 + 0.1 * jax.random.normal(k_m1, (C_OUT,))))
    bn2 = dict(gamma=1.0 + 0.1 * jax.random.normal(k_g2, (C_OUT,)),
               beta=0.1 * jax.random.normal(k_b2, (C_OUT,)),
               mean=0.1 * jax.random.normal(k_m2, (C_OUT,)),
               var=jnp.abs(1.0 + 0.1 * jax.random.normal(k_m2, (C_OUT,))))

    ref = jax.block_until_ready(_reference(x, w3, w1, bn1, bn2))

    # Exercise the row-tiled fori_loop path (2 tiles of 8 rows each).
    out = attention_refinement_module(x, w3, w1, bn1, bn2, row_tile=8)
    out = jax.block_until_ready(out)
    assert out.shape == (N, C_OUT, H, W), out.shape
    assert jnp.allclose(out, ref, atol=1e-4, rtol=1e-4), (
        "row_tile=8 max|diff|=%g" % float(jnp.max(jnp.abs(out - ref))))

    # Exercise the auto-picked tile (single tile at these small shapes).
    out2 = attention_refinement_module(x, w3, w1, bn1, bn2)
    out2 = jax.block_until_ready(out2)
    assert jnp.allclose(out2, ref, atol=1e-4, rtol=1e-4), (
        "auto tile max|diff|=%g" % float(jnp.max(jnp.abs(out2 - ref))))

    print("KERNEL_OK")
</pallas_src>

<mosaic_0001>
module attributes {stable_mosaic.version = 11 : i64} {
  func.func @_arm_kernel(%arg0: i32, %arg1: memref<1x16x16x4xbf16, #tpu.memory_space<vmem>>, %arg2: memref<3x12x8xbf16, #tpu.memory_space<vmem>>, %arg3: memref<1x8xf32, #tpu.memory_space<vmem>>, %arg4: memref<8x8xf32, #tpu.memory_space<vmem>>, %arg5: memref<1x8xf32, #tpu.memory_space<vmem>>, %arg6: memref<1x16x16x8xf32, #tpu.memory_space<vmem>>, %arg7: memref<18x32x4xbf16, #tpu.memory_space<vmem>>) attributes {dimension_semantics = [#tpu.dimension_semantics<parallel>], iteration_bounds = array<i64: 2>, scalar_prefetch = 0 : i64, scratch_operands = 1 : i64, tpu.core_type = #tpu.core_type<tc>, window_params = [{transform_indices = @transform_0, window_bounds = array<i64: 1, 16, 16, 4>}, {pipeline_mode = #tpu.pipeline_mode<synchronous>, transform_indices = @transform_1, window_bounds = array<i64: 3, 12, 8>}, {pipeline_mode = #tpu.pipeline_mode<synchronous>, transform_indices = @transform_2, window_bounds = array<i64: 1, 8>}, {pipeline_mode = #tpu.pipeline_mode<synchronous>, transform_indices = @transform_3, window_bounds = array<i64: 8, 8>}, {pipeline_mode = #tpu.pipeline_mode<synchronous>, transform_indices = @transform_4, window_bounds = array<i64: 1, 8>}, {transform_indices = @transform_5, window_bounds = array<i64: 1, 16, 16, 8>}]} {
    %cst = arith.constant 0.000000e+00 : bf16
    %0 = vector.broadcast %cst : bf16 to vector<1x32x4xbf16>
    %c0 = arith.constant 0 : index
    %c0_0 = arith.constant 0 : index
    %c0_1 = arith.constant 0 : index
    %1 = vector.load %arg7[%c0, %c0_0, %c0_1] : memref<18x32x4xbf16, #tpu.memory_space<vmem>>, vector<1x32x4xbf16>
    tpu.vector_store %arg7[%c0, %c0_0, %c0_1], %0 {strides = array<i32>} : memref<18x32x4xbf16, #tpu.memory_space<vmem>>, vector<1x32x4xbf16>,
    %cst_2 = arith.constant 0.000000e+00 : bf16
    %2 = vector.broadcast %cst_2 : bf16 to vector<1x32x4xbf16>
    %c17 = arith.constant 17 : index
    %c0_3 = arith.constant 0 : index
    %c0_4 = arith.constant 0 : index
    %3 = vector.load %arg7[%c17, %c0_3, %c0_4] : memref<18x32x4xbf16, #tpu.memory_space<vmem>>, vector<1x32x4xbf16>
    tpu.vector_store %arg7[%c17, %c0_3, %c0_4], %2 {strides = array<i32>} : memref<18x32x4xbf16, #tpu.memory_space<vmem>>, vector<1x32x4xbf16>,
    %cst_5 = arith.constant 0.000000e+00 : bf16
    %4 = vector.broadcast %cst_5 : bf16 to vector<18x8x4xbf16>
    %c0_6 = arith.constant 0 : index
    %c0_7 = arith.constant 0 : index
    %c0_8 = arith.constant 0 : index
    %5 = vector.load %arg7[%c0_6, %c0_7, %c0_8] : memref<18x32x4xbf16, #tpu.memory_space<vmem>>, vector<18x8x4xbf16>
    tpu.vector_store %arg7[%c0_6, %c0_7, %c0_8], %4 {strides = array<i32>} : memref<18x32x4xbf16, #tpu.memory_space<vmem>>, vector<18x8x4xbf16>,
    %cst_9 = arith.constant 0.000000e+00 : bf16
    %6 = vector.broadcast %cst_9 : bf16 to vector<18x8x4xbf16>
    %c0_10 = arith.constant 0 : index
    %c24 = arith.constant 24 : index
    %c0_11 = arith.constant 0 : index
    %7 = vector.load %arg7[%c0_10, %c24, %c0_11] : memref<18x32x4xbf16, #tpu.memory_space<vmem>>, vector<18x8x4xbf16>
    tpu.vector_store %arg7[%c0_10, %c24, %c0_11], %6 {strides = array<i32>} : memref<18x32x4xbf16, #tpu.memory_space<vmem>>, vector<18x8x4xbf16>,
    %c0_12 = arith.constant 0 : index
    %c0_13 = arith.constant 0 : index
    %c0_14 = arith.constant 0 : index
    %c0_15 = arith.constant 0 : index
    %8 = vector.load %arg1[%c0_12, %c0_13, %c0_14, %c0_15] : memref<1x16x16x4xbf16, #tpu.memory_space<vmem>>, vector<1x16x16x4xbf16>
    %9 = vector.shape_cast %8 : vector<1x16x16x4xbf16> to vector<16x16x4xbf16>
    %c1 = arith.constant 1 : index
    %c8 = arith.constant 8 : index
    %c0_16 = arith.constant 0 : index
    %10 = vector.load %arg7[%c1, %c8, %c0_16] : memref<18x32x4xbf16, #tpu.memory_space<vmem>>, vector<16x16x4xbf16>
    tpu.vector_store %arg7[%c1, %c8, %c0_16], %9 {strides = array<i32>} : memref<18x32x4xbf16, #tpu.memory_space<vmem>>, vector<16x16x4xbf16>,
    %c0_17 = arith.constant 0 : index
    %c0_18 = arith.constant 0 : index
    %11 = vector.load %arg3[%c0_17, %c0_18] : memref<1x8xf32, #tpu.memory_space<vmem>>, vector<1x8xf32>
    %cst_19 = arith.constant 0.000000e+00 : f32
    %12 = vector.broadcast %cst_19 : f32 to vector<1x8xf32>
    %c0_i32 = arith.constant 0 : i32
    %c2_i32 = arith.constant 2 : i32
    %13 = arith.addi %c0_i32, %c2_i32 : i32
    %c1_i32 = arith.constant 1 : i32
    %14 = scf.for %arg8 = %c0_i32 to %13 step %c1_i32 iter_args(%arg9 = %12) -> (vector<1x8xf32>)  : i32 {
      %c8_i32 = arith.constant 8 : i32
      %31 = arith.muli %arg8, %c8_i32 : i32
      %32 = tpu.assume_multiple %31, 8 : i32
      %33 = arith.index_cast %32 : i32 to index
      %c0_36 = arith.constant 0 : index
      %c0_37 = arith.constant 0 : index
      %34 = vector.load %arg7[%33, %c0_36, %c0_37] : memref<18x32x4xbf16, #tpu.memory_space<vmem>>, vector<10x32x4xbf16>
      %35 = vector.extract_strided_slice %34 {offsets = [0, 7, 0], sizes = [10, 16, 4], strides = [1, 1, 1]} : vector<10x32x4xbf16> to vector<10x16x4xbf16>
      %36 = vector.extract_strided_slice %34 {offsets = [0, 8, 0], sizes = [10, 16, 4], strides = [1, 1, 1]} : vector<10x32x4xbf16> to vector<10x16x4xbf16>
      %37 = vector.extract_strided_slice %34 {offsets = [0, 9, 0], sizes = [10, 16, 4], strides = [1, 1, 1]} : vector<10x32x4xbf16> to vector<10x16x4xbf16>
      %38 = tpu.concatenate %35, %36, %37 in 2 : vector<10x16x4xbf16>, vector<10x16x4xbf16>, vector<10x16x4xbf16> -> vector<10x16x12xbf16>
      %cst_38 = arith.constant 0.000000e+00 : f32
      %39 = vector.broadcast %cst_38 : f32 to vector<128x8xf32>
      %40 = vector.extract_strided_slice %38 {offsets = [0, 0, 0], sizes = [8, 16, 12], strides = [1, 1, 1]} : vector<10x16x12xbf16> to vector<8x16x12xbf16>
      %41 = vector.shape_cast %40 : vector<8x16x12xbf16> to vector<128x12xbf16>
      %c0_39 = arith.constant 0 : index
      %c0_40 = arith.constant 0 : index
      %c0_41 = arith.constant 0 : index
      %42 = vector.load %arg2[%c0_39, %c0_40, %c0_41] : memref<3x12x8xbf16, #tpu.memory_space<vmem>>, vector<1x12x8xbf16>
      %43 = vector.shape_cast %42 : vector<1x12x8xbf16> to vector<12x8xbf16>
      %cst_42 = arith.constant dense<0.000000e+00> : vector<128x8xf32>
      %44 = tpu.matmul %41, %43, %cst_42 {dimension_numbers = #tpu.dot_dimension_numbers<[1], [0], [0], [1], [0, 0, 1, 1], [], []>} : vector<128x12xbf16>, vector<12x8xbf16>, vector<128x8xf32> -> vector<128x8xf32>
      %45 = arith.addf %39, %44 : vector<128x8xf32>
      %46 = vector.extract_strided_slice %38 {offsets = [1, 0, 0], sizes = [8, 16, 12], strides = [1, 1, 1]} : vector<10x16x12xbf16> to vector<8x16x12xbf16>
      %47 = vector.shape_cast %46 : vector<8x16x12xbf16> to vector<128x12xbf16>
      %c1_43 = arith.constant 1 : index
      %c0_44 = arith.constant 0 : index
      %c0_45 = arith.constant 0 : index
      %48 = vector.load %arg2[%c1_43, %c0_44, %c0_45] : memref<3x12x8xbf16, #tpu.memory_space<vmem>>, vector<1x12x8xbf16>
      %49 = vector.shape_cast %48 : vector<1x12x8xbf16> to vector<12x8xbf16>
      %cst_46 = arith.constant dense<0.000000e+00> : vector<128x8xf32>
      %50 = tpu.matmul %47, %49, %cst_46 {dimension_numbers = #tpu.dot_dimension_numbers<[1], [0], [0], [1], [0, 0, 1, 1], [], []>} : vector<128x12xbf16>, vector<12x8xbf16>, vector<128x8xf32> -> vector<128x8xf32>
      %51 = arith.addf %45, %50 : vector<128x8xf32>
      %52 = vector.extract_strided_slice %38 {offsets = [2, 0, 0], sizes = [8, 16, 12], strides = [1, 1, 1]} : vector<10x16x12xbf16> to vector<8x16x12xbf16>
      %53 = vector.shape_cast %52 : vector<8x16x12xbf16> to vector<128x12xbf16>
      %c2 = arith.constant 2 : index
      %c0_47 = arith.constant 0 : index
      %c0_48 = arith.constant 0 : index
      %54 = vector.load %arg2[%c2, %c0_47, %c0_48] : memref<3x12x8xbf16, #tpu.memory_space<vmem>>, vector<1x12x8xbf16>
      %55 = vector.shape_cast %54 : vector<1x12x8xbf16> to vector<12x8xbf16>
      %cst_49 = arith.constant dense<0.000000e+00> : vector<128x8xf32>
      %56 = tpu.matmul %53, %55, %cst_49 {dimension_numbers = #tpu.dot_dimension_numbers<[1], [0], [0], [1], [0, 0, 1, 1], [], []>} : vector<128x12xbf16>, vector<12x8xbf16>, vector<128x8xf32> -> vector<128x8xf32>
      %57 = arith.addf %51, %56 : vector<128x8xf32>
      %58 = vector.broadcast %11 : vector<1x8xf32> to vector<128x8xf32>
      %59 = arith.addf %57, %58 : vector<128x8xf32>
      %cst_50 = arith.constant 0.000000e+00 : f32
      %60 = vector.broadcast %cst_50 : f32 to vector<128x8xf32>
      %61 = arith.maximumf %59, %60 : vector<128x8xf32>
      %62 = vector.shape_cast %61 : vector<128x8xf32> to vector<1x8x16x8xf32>
      %c0_51 = arith.constant 0 : index
      %63 = arith.index_cast %32 : i32 to index
      %c0_52 = arith.constant 0 : index
      %c0_53 = arith.constant 0 : index
      %64 = vector.load %arg6[%c0_51, %63, %c0_52, %c0_53] : memref<1x16x16x8xf32, #tpu.memory_space<vmem>>, vector<1x8x16x8xf32>
      tpu.vector_store %arg6[%c0_51, %63, %c0_52, %c0_53], %62 {strides = array<i32>} : memref<1x16x16x8xf32, #tpu.memory_space<vmem>>, vector<1x8x16x8xf32>,
      %cst_54 = arith.constant dense<0.000000e+00> : vector<8xf32>
      %65 = vector.multi_reduction <add>, %61, %cst_54 [0] : vector<128x8xf32> to vector<8xf32>
      %66 = vector.shape_cast %65 : vector<8xf32> to vector<1x8xf32>
      %67 = arith.addf %arg9, %66 : vector<1x8xf32>
      scf.yield %67 : vector<1x8xf32>
    }
    %c2_i32_20 = arith.constant 2 : i32
    %cst_21 = arith.constant 3.906250e-03 : f32
    %15 = vector.broadcast %cst_21 : f32 to vector<1x8xf32>
    %16 = arith.mulf %14, %15 : vector<1x8xf32>
    %c0_22 = arith.constant 0 : index
    %c0_23 = arith.constant 0 : index
    %17 = vector.load %arg4[%c0_22, %c0_23] : memref<8x8xf32, #tpu.memory_space<vmem>>, vector<8x8xf32>
    %cst_24 = arith.constant dense<0.000000e+00> : vector<1x8xf32>
    %18 = tpu.matmul %16, %17, %cst_24 {dimension_numbers = #tpu.dot_dimension_numbers<[1], [0], [0], [1], [0, 0, 1, 1], [], []>} : vector<1x8xf32>, vector<8x8xf32>, vector<1x8xf32> -> vector<1x8xf32>
    %c0_25 = arith.constant 0 : index
    %c0_26 = arith.constant 0 : index
    %19 = vector.load %arg5[%c0_25, %c0_26] : memref<1x8xf32, #tpu.memory_space<vmem>>, vector<1x8xf32>
    %20 = arith.addf %18, %19 : vector<1x8xf32>
    %21 = arith.negf %20 : vector<1x8xf32>
    %22 = math.exp %21 : vector<1x8xf32>
    %cst_27 = arith.constant 1.000000e+00 : f32
    %23 = vector.broadcast %cst_27 : f32 to vector<1x8xf32>
    %24 = arith.addf %23, %22 : vector<1x8xf32>
    %25 = arith.divf %23, %24 : vector<1x8xf32>
    %c0_28 = arith.constant 0 : index
    %c0_29 = arith.constant 0 : index
    %c0_30 = arith.constant 0 : index
    %c0_31 = arith.constant 0 : index
    %26 = vector.load %arg6[%c0_28, %c0_29, %c0_30, %c0_31] : memref<1x16x16x8xf32, #tpu.memory_space<vmem>>, vector<1x16x16x8xf32>
    %27 = vector.shape_cast %25 : vector<1x8xf32> to vector<1x1x1x8xf32>
    %28 = vector.broadcast %27 : vector<1x1x1x8xf32> to vector<1x16x16x8xf32>
    %29 = arith.mulf %26, %28 : vector<1x16x16x8xf32>
    %c0_32 = arith.constant 0 : index
    %c0_33 = arith.constant 0 : index
    %c0_34 = arith.constant 0 : index
    %c0_35 = arith.constant 0 : index
    %30 = vector.load %arg6[%c0_32, %c0_33, %c0_34, %c0_35] : memref<1x16x16x8xf32, #tpu.memory_space<vmem>>, vector<1x16x16x8xf32>
    tpu.vector_store %arg6[%c0_32, %c0_33, %c0_34, %c0_35], %29 {strides = array<i32>} : memref<1x16x16x8xf32, #tpu.memory_space<vmem>>, vector<1x16x16x8xf32>,
    return
  }
  func.func @transform_0(%arg0: i32) -> (i32, i32, i32, i32) {
    %c0_i32 = arith.constant 0 : i32
    %c0_i32_0 = arith.constant 0 : i32
    %c0_i32_1 = arith.constant 0 : i32
    %c0_i32_2 = arith.constant 0 : i32
    return %arg0, %c0_i32, %c0_i32_0, %c0_i32_1 : i32, i32, i32, i32
  }
  func.func @transform_1(%arg0: i32) -> (i32, i32, i32) {
    %c0_i32 = arith.constant 0 : i32
    %c0_i32_0 = arith.constant 0 : i32
    %c0_i32_1 = arith.constant 0 : i32
    %c0_i32_2 = arith.constant 0 : i32
    return %c0_i32, %c0_i32_0, %c0_i32_1 : i32, i32, i32
  }
  func.func @transform_2(%arg0: i32) -> (i32, i32) {
    %c0_i32 = arith.constant 0 : i32
    %c0_i32_0 = arith.constant 0 : i32
    %c0_i32_1 = arith.constant 0 : i32
    return %c0_i32, %c0_i32_0 : i32, i32
  }
  func.func @transform_3(%arg0: i32) -> (i32, i32) {
    %c0_i32 = arith.constant 0 : i32
    %c0_i32_0 = arith.constant 0 : i32
    %c0_i32_1 = arith.constant 0 : i32
    return %c0_i32, %c0_i32_0 : i32, i32
  }
  func.func @transform_4(%arg0: i32) -> (i32, i32) {
    %c0_i32 = arith.constant 0 : i32
    %c0_i32_0 = arith.constant 0 : i32
    %c0_i32_1 = arith.constant 0 : i32
    return %c0_i32, %c0_i32_0 : i32, i32
  }
  func.func @transform_5(%arg0: i32) -> (i32, i32, i32, i32) {
    %c0_i32 = arith.constant 0 : i32
    %c0_i32_0 = arith.constant 0 : i32
    %c0_i32_1 = arith.constant 0 : i32
    %c0_i32_2 = arith.constant 0 : i32
    return %arg0, %c0_i32, %c0_i32_0, %c0_i32_1 : i32, i32, i32, i32
  }
}

</mosaic_0001>

<llo_original>
// kernel: attention_refinement_module.1
$region0: #{attention_refinement_module.1}
  #allocation0 [shape = 'u32[]', space=smem, size = 0x4, offset = 0x4, fixed_abs, tag = 'smem constant byte address 0x4 - core index']
  #allocation1 [shape = 'u32[144,128]{1,0:T(1,128)}', space=vmem, size = 0x12000, scoped, tag = 'internal scratch']
  #allocation2 [shape = 'bf16[18,32,4]{2,1,0:T(16,128)(2,1)}', space=vmem, size = 0x24000, scoped, tag = 'scratch operand']
  %s0 = inlined_call_operand.vmem [shape: bf16[2,16,16,4], index: 0, kind: input, shape index: {}]
  %s1 = inlined_call_operand.vmem [shape: bf16[3,12,8], index: 1, kind: input, shape index: {}]
  %s2 = inlined_call_operand.vmem [shape: f32[1,8], index: 2, kind: input, shape index: {}]
  %s3 = inlined_call_operand.vmem [shape: f32[8,8], index: 3, kind: input, shape index: {}]
  %s4 = inlined_call_operand.vmem [shape: f32[1,8], index: 4, kind: input, shape index: {}]
  %s5 = inlined_call_operand.vmem [shape: f32[2,16,16,8], index: 5, kind: output, shape index: {}]
  %s6 = sld [smem:[#allocation0]]
  $region60: #{attention_refinement_module.1} parent=0
    _
  %s8 = ssub.s32 1, %s6
  %s9 = scalar_select 0, %s8, %s6
  loop: start=0, step=1, limit=4
  $region2: #{attention_refinement_module.1} parent=0 // loop_pre_header
    _
  $region3: #{attention_refinement_module.1} parent=0 // loop_header
    %s11 = sphi 0, %s15
    %p12 = scmp.ge.s32.totalorder %s11, 4
    %s21 = sphi 0, %s23
    %s24 = sphi 0, %s21
    %s25 = sphi 0, %s24
    %s41 = sphi 0, %s25
    %s45 = sphi 0, %s45
    %s47 = sphi 0, %s45
    %s48 = sphi 0, %s47
    %s62 = sphi 0, %s48
    %s66 = sphi 0, %s66
    %s68 = sphi 0, %s66
    %s69 = sphi 0, %s68
    %s83 = sphi 0, %s69
    %s87 = sphi 0, %s87
    %s89 = sphi 0, %s87
    %s90 = sphi 0, %s89
    %s104 = sphi 0, %s90
    %s108 = sphi 0, %s108
    %s110 = sphi 0, %s108
    %s111 = sphi 0, %s110
    %s125 = sphi 0, %s111
    %s131 = sphi 0, %s133
    %s134 = sphi 0, %s131
    %s135 = sphi 0, %s134
    %s151 = sphi 0, %s135
  $region4: #{attention_refinement_module.1} parent=0 // loop_header_branch
    %14 = sbr.rel (%p12) target = $region8
  $region5: #{attention_refinement_module.1} parent=0 // loop_body
    %s16 = ssub.s32 %s11, 1
    %s17 = ssub.s32 %s11, 2
    %s18 = sadd.s32 %s11, 1
    %s19 = ssub.s32 %s11, %s18
    %p20 = scmp.eq.s32.totalorder %s19, 0
    %s22 = sadd.s32 %s21, 1
    %s23 = scalar_select %p20, %s21, %s22
    %p26 = pneg %p20
    %p27 = scmp.eq.s32.totalorder %s11, 1
    %p28 = por %p26, %p27
    %p29 = scmp.ne.s32.totalorder %s21, %s24
    %p30 = scmp.eq.s32.totalorder %s11, 0
    %p31 = por %p29, %p30
    %p32 = scmp.ne.s32.totalorder %s21, %s24
    %p33 = scmp.eq.s32.totalorder %s16, 1
    %p34 = por %p32, %p33
    %p35 = scmp.ne.s32.totalorder %s24, %s25
    %p36 = scmp.eq.s32.totalorder %s16, 0
    %p37 = por %p35, %p36
    %p38 = scmp.ne.s32.totalorder %s24, %s25
    %p39 = scmp.eq.s32.totalorder %s17, 1
    %p40 = por %p38, %p39
    %p42 = scmp.ne.s32.totalorder %s25, %s41
    %p43 = scmp.eq.s32.totalorder %s17, 0
    %p44 = por %p42, %p43
    %s46 = sadd.s32 %s45, 1
    %p49 = scmp.eq.s32.totalorder %s11, 1
    %p50 = scmp.ne.s32.totalorder %s45, %s47
    %p51 = scmp.eq.s32.totalorder %s11, 0
    %p52 = por %p50, %p51
    %p53 = scmp.ne.s32.totalorder %s45, %s47
    %p54 = scmp.eq.s32.totalorder %s16, 1
    %p55 = por %p53, %p54
    %p56 = scmp.ne.s32.totalorder %s47, %s48
    %p57 = scmp.eq.s32.totalorder %s16, 0
    %p58 = por %p56, %p57
    %p59 = scmp.ne.s32.totalorder %s47, %s48
    %p60 = scmp.eq.s32.totalorder %s17, 1
    %p61 = por %p59, %p60
    %p63 = scmp.ne.s32.totalorder %s48, %s62
    %p64 = scmp.eq.s32.totalorder %s17, 0
    %p65 = por %p63, %p64
    %s67 = sadd.s32 %s66, 1
    %p70 = scmp.eq.s32.totalorder %s11, 1
    %p71 = scmp.ne.s32.totalorder %s66, %s68
    %p72 = scmp.eq.s32.totalorder %s11, 0
    %p73 = por %p71, %p72
    %p74 = scmp.ne.s32.totalorder %s66, %s68
    %p75 = scmp.eq.s32.totalorder %s16, 1
    %p76 = por %p74, %p75
    %p77 = scmp.ne.s32.totalorder %s68, %s69
    %p78 = scmp.eq.s32.totalorder %s16, 0
    %p79 = por %p77, %p78
    %p80 = scmp.ne.s32.totalorder %s68, %s69
    %p81 = scmp.eq.s32.totalorder %s17, 1
    %p82 = por %p80, %p81
    %p84 = scmp.ne.s32.totalorder %s69, %s83
    %p85 = scmp.eq.s32.totalorder %s17, 0
    %p86 = por %p84, %p85
    %s88 = sadd.s32 %s87, 1
    %p91 = scmp.eq.s32.totalorder %s11, 1
    %p92 = scmp.ne.s32.totalorder %s87, %s89
    %p93 = scmp.eq.s32.totalorder %s11, 0
    %p94 = por %p92, %p93
    %p95 = scmp.ne.s32.totalorder %s87, %s89
    %p96 = scmp.eq.s32.totalorder %s16, 1
    %p97 = por %p95, %p96
    %p98 = scmp.ne.s32.totalorder %s89, %s90
    %p99 = scmp.eq.s32.totalorder %s16, 0
    %p100 = por %p98, %p99
    %p101 = scmp.ne.s32.totalorder %s89, %s90
    %p102 = scmp.eq.s32.totalorder %s17, 1
    %p103 = por %p101, %p102
    %p105 = scmp.ne.s32.totalorder %s90, %s104
    %p106 = scmp.eq.s32.totalorder %s17, 0
    %p107 = por %p105, %p106
    %s109 = sadd.s32 %s108, 1
    %p112 = scmp.eq.s32.totalorder %s11, 1
    %p113 = scmp.ne.s32.totalorder %s108, %s110
    %p114 = scmp.eq.s32.totalorder %s11, 0
    %p115 = por %p113, %p114
    %p116 = scmp.ne.s32.totalorder %s108, %s110
    %p117 = scmp.eq.s32.totalorder %s16, 1
    %p118 = por %p116, %p117
    %p119 = scmp.ne.s32.totalorder %s110, %s111
    %p120 = scmp.eq.s32.totalorder %s16, 0
    %p121 = por %p119, %p120
    %p122 = scmp.ne.s32.totalorder %s110, %s111
    %p123 = scmp.eq.s32.totalorder %s17, 1
    %p124 = por %p122, %p123
    %p126 = scmp.ne.s32.totalorder %s111, %s125
    %p127 = scmp.eq.s32.totalorder %s17, 0
    %p128 = por %p126, %p127
    %s129 = ssub.s32 %s11, %s18
    %p130 = scmp.eq.s32.totalorder %s129, 0
    %s132 = sadd.s32 %s131, 1
    %s133 = scalar_select %p130, %s131, %s132
    %p136 = pneg %p130
    %p137 = scmp.eq.s32.totalorder %s11, 1
    %p138 = por %p136, %p137
    %p139 = scmp.ne.s32.totalorder %s131, %s134
    %p140 = scmp.eq.s32.totalorder %s11, 0
    %p141 = por %p139, %p140
    %p142 = scmp.ne.s32.totalorder %s131, %s134
    %p143 = scmp.eq.s32.totalorder %s16, 1
    %p144 = por %p142, %p143
    %p145 = scmp.ne.s32.totalorder %s134, %s135
    %p146 = scmp.eq.s32.totalorder %s16, 0
    %p147 = por %p145, %p146
    %p148 = scmp.ne.s32.totalorder %s134, %s135
    %p149 = scmp.eq.s32.totalorder %s17, 1
    %p150 = por %p148, %p149
    %p152 = scmp.ne.s32.totalorder %s135, %s151
    %p153 = scmp.eq.s32.totalorder %s17, 0
    %p154 = por %p152, %p153
    %p155 = scmp.le.s32.totalorder 1, %s11
    %p156 = scmp.lt.s32.totalorder %s11, 3
    %p157 = pnand %p155, %p156
    %p158 = pneg %p157
    // Predicated region
    $region9: #{attention_refinement_module.1} parent=5 // pred_check
      _
    $region10: #{attention_refinement_module.1} parent=5 // pred_check_branch
      %160 = sbr.rel (%p157) target = $region12
    $region11: #{attention_refinement_module.1} parent=5 // pred_region
      %s161 = ssub.s32 %s11, 1
      // Predicated region
      $region13: #{attention_refinement_module.1} parent=11 // pred_check
        %p162 = pneg %p58
      $region14: #{attention_refinement_module.1} parent=11 // pred_check_branch
        %164 = sbr.rel (%p162) target = $region16
      $region15: #{attention_refinement_module.1} parent=11 // pred_region
        _
      $region16: #{attention_refinement_module.1} parent=11 // pred_fallthru
        _
      // Predicated region
      $region17: #{attention_refinement_module.1} parent=11 // pred_check
        %p165 = pneg %p79
      $region18: #{attention_refinement_module.1} parent=11 // pred_check_branch
        %167 = sbr.rel (%p165) target = $region20
      $region19: #{attention_refinement_module.1} parent=11 // pred_region
        _
      $region20: #{attention_refinement_module.1} parent=11 // pred_fallthru
        _
      // Predicated region
      $region21: #{attention_refinement_module.1} parent=11 // pred_check
        %p168 = pneg %p100
      $region22: #{attention_refinement_module.1} parent=11 // pred_check_branch
        %170 = sbr.rel (%p168) target = $region24
      $region23: #{attention_refinement_module.1} parent=11 // pred_region
        _
      $region24: #{attention_refinement_module.1} parent=11 // pred_fallthru
        _
      // Predicated region
      $region25: #{attention_refinement_module.1} parent=11 // pred_check
        %p171 = pneg %p121
      $region26: #{attention_refinement_module.1} parent=11 // pred_check_branch
        %173 = sbr.rel (%p171) target = $region28
      $region27: #{attention_refinement_module.1} parent=11 // pred_region
        _
      $region28: #{attention_refinement_module.1} parent=11 // pred_fallthru
        _
    $region12: #{attention_refinement_module.1} parent=5 // pred_fallthru
      _
    %p174 = scmp.lt.s32.totalorder %s11, 2
    // Predicated region
    $region29: #{attention_refinement_module.1} parent=5 // pred_check
      %p175 = pneg %p174
    $region30: #{attention_refinement_module.1} parent=5 // pred_check_branch
      %177 = sbr.rel (%p175) target = $region32
    $region31: #{attention_refinement_module.1} parent=5 // pred_region
      // Predicated region
      $region33: #{attention_refinement_module.1} parent=31 // pred_check
        %p178 = pneg %p31
      $region34: #{attention_refinement_module.1} parent=31 // pred_check_branch
        %180 = sbr.rel (%p178) target = $region36
      $region35: #{attention_refinement_module.1} parent=31 // pred_region
        %p181 = scmp.lt.s32.totalorder %s11, 1
        %s182 = scalar_select %p181, %s11, 1
        %s183 = smul.addr %s182, 32
        %s184 = smul.addr %s183, 4
        %s185 = scalar_lea.vmem %s0, %s184
      $region36: #{attention_refinement_module.1} parent=31 // pred_fallthru
        _
    $region32: #{attention_refinement_module.1} parent=5 // pred_fallthru
      _
    %p186 = scmp.le.s32.totalorder 1, %s11
    %p187 = scmp.lt.s32.totalorder %s11, 3
    %p188 = pnand %p186, %p187
    %p189 = pneg %p188
    // Predicated region
    $region37: #{attention_refinement_module.1} parent=5 // pred_check
      _
    $region38: #{attention_refinement_module.1} parent=5 // pred_check_branch
      %191 = sbr.rel (%p188) target = $region40
    $region39: #{attention_refinement_module.1} parent=5 // pred_region
      %s192 = ssub.s32 %s11, 1
      %p193 = scmp.lt.s32.totalorder %s16, 1
      %s194 = scalar_select %p193, %s16, 1
      %s195 = smul.addr %s194, 32
      %s196 = smul.addr %s195, 4
      %s197 = scalar_lea.vmem %s0, %s196
      %p198 = pneg %p37
      %p199 = pneg %p34
      %p200 = pneg %p58
      %p201 = pneg %p55
      %p202 = pneg %p79
      %p203 = pneg %p76
      %p204 = pneg %p100
      %p205 = pneg %p97
      %p206 = pneg %p121
      %p207 = pneg %p118
      %p208 = pneg %p147
      %p209 = pneg %p144
      %p210 = scmp.lt.s32.totalorder %s16, 1
      %s211 = scalar_select %p210, %s16, 1
      %s212 = smul.addr %s211, 32
      %s213 = smul.addr %s212, 8
      %s214 = scalar_lea.vmem %s5, %s213
      %p215 = scmp.lt.s32.totalorder %s16, 1
      %s216 = scalar_select %p215, %s16, 1
      %s217 = smul.addr %s216, 32
      %s218 = smul.addr %s217, 4
      %s219 = scalar_lea.vmem %s0, %s218
      %p220 = scmp.lt.s32.totalorder %s16, 1
      %s221 = scalar_select %p220, %s16, 1
      %s222 = smul.addr %s221, 32
      %s223 = smul.addr %s222, 8
      %s224 = scalar_lea.vmem %s5, %s223
      %vm226 = vcmask 31744
      %227 = vst.msk [vmem:[#allocation2] sm:$0xff] %vm226, 0
      %228 = vst.msk [vmem:[#allocation2 + $0x8] sm:$0xff] %vm226, 0
      %s229 = scalar_lea.vmem [#allocation2], 272
      %230 = vst.msk [vmem:[%s229] sm:$0xff] %vm226, 0
      %231 = vst.msk [vmem:[%s229 + $0x8] sm:$0xff] %vm226, 0
      %vm232 = vcmask 27648
      %233 = vst.msk [vmem:[#allocation2] sm:$0xf] %vm232, 0
      %234 = vst.msk [vmem:[#allocation2 + $0x10] sm:$0xf] %vm232, 0
      %235 = vst.msk [vmem:[#allocation2 + $0x20] sm:$0xf] %vm232, 0
      %236 = vst.msk [vmem:[#allocation2 + $0x30] sm:$0xf] %vm232, 0
      %237 = vst.msk [vmem:[#allocation2 + $0x40] sm:$0xf] %vm232, 0
      %238 = vst.msk [vmem:[#allocation2 + $0x50] sm:$0xf] %vm232, 0
      %239 = vst.msk [vmem:[#allocation2 + $0x60] sm:$0xf] %vm232, 0
      %240 = vst.msk [vmem:[#allocation2 + $0x70] sm:$0xf] %vm232, 0
      %241 = vst.msk [vmem:[#allocation2 + $0x80] sm:$0xf] %vm232, 0
      %242 = vst.msk [vmem:[#allocation2 + $0x90] sm:$0xf] %vm232, 0
      %243 = vst.msk [vmem:[#allocation2 + $0xa0] sm:$0xf] %vm232, 0
      %244 = vst.msk [vmem:[#allocation2 + $0xb0] sm:$0xf] %vm232, 0
      %245 = vst.msk [vmem:[#allocation2 + $0xc0] sm:$0xf] %vm232, 0
      %246 = vst.msk [vmem:[#allocation2 + $0xd0] sm:$0xf] %vm232, 0
      %247 = vst.msk [vmem:[#allocation2 + $0xe0] sm:$0xf] %vm232, 0
      %248 = vst.msk [vmem:[#allocation2 + $0xf0] sm:$0xf] %vm232, 0
      %249 = vst.msk [vmem:[#allocation2 + $0x100] sm:$0xf] %vm232, 0
      %250 = vst.msk [vmem:[#allocation2 + $0x110] sm:$0xf] %vm232, 0
      %vm251 = vcmask 31748
      %252 = vst.msk [vmem:[#allocation2 + $0x8] sm:$0xf0] %vm251, 0
      %253 = vst.msk [vmem:[#allocation2 + $0x18] sm:$0xf0] %vm251, 0
      %254 = vst.msk [vmem:[#allocation2 + $0x28] sm:$0xf0] %vm251, 0
      %255 = vst.msk [vmem:[#allocation2 + $0x38] sm:$0xf0] %vm251, 0
      %256 = vst.msk [vmem:[#allocation2 + $0x48] sm:$0xf0] %vm251, 0
      %257 = vst.msk [vmem:[#allocation2 + $0x58] sm:$0xf0] %vm251, 0
      %258 = vst.msk [vmem:[#allocation2 + $0x68] sm:$0xf0] %vm251, 0
      %259 = vst.msk [vmem:[#allocation2 + $0x78] sm:$0xf0] %vm251, 0
      %260 = vst.msk [vmem:[#allocation2 + $0x88] sm:$0xf0] %vm251, 0
      %261 = vst.msk [vmem:[#allocation2 + $0x98] sm:$0xf0] %vm251, 0
      %262 = vst.msk [vmem:[#allocation2 + $0xa8] sm:$0xf0] %vm251, 0
      %263 = vst.msk [vmem:[#allocation2 + $0xb8] sm:$0xf0] %vm251, 0
      %264 = vst.msk [vmem:[#allocation2 + $0xc8] sm:$0xf0] %vm251, 0
      %265 = vst.msk [vmem:[#allocation2 + $0xd8] sm:$0xf0] %vm251, 0
      %266 = vst.msk [vmem:[#allocation2 + $0xe8] sm:$0xf0] %vm251, 0
      %267 = vst.msk [vmem:[#allocation2 + $0xf8] sm:$0xf0] %vm251, 0
      %268 = vst.msk [vmem:[#allocation2 + $0x108] sm:$0xf0] %vm251, 0
      %269 = vst.msk [vmem:[#allocation2 + $0x118] sm:$0xf0] %vm251, 0
      %v270 = vld [vmem:[%s219] sm:$0xf]
      %v271 = vld [vmem:[%s219 + $0x4] sm:$0xf]
      %v272 = vld [vmem:[%s219 + $0x8] sm:$0xf]
      %v273 = vld [vmem:[%s219 + $0xc] sm:$0xf]
      %v274 = vld [vmem:[%s219 + $0x10] sm:$0xf]
      %v275 = vld [vmem:[%s219 + $0x14] sm:$0xf]
      %v276 = vld [vmem:[%s219 + $0x18] sm:$0xf]
      %v277 = vld [vmem:[%s219 + $0x1c] sm:$0xf]
      %v278 = vld [vmem:[%s219 + $0x20] sm:$0xf]
      %v279 = vld [vmem:[%s219 + $0x24] sm:$0xf]
      %v280 = vld [vmem:[%s219 + $0x28] sm:$0xf]
      %v281 = vld [vmem:[%s219 + $0x2c] sm:$0xf]
      %v282 = vld [vmem:[%s219 + $0x30] sm:$0xf]
      %v283 = vld [vmem:[%s219 + $0x34] sm:$0xf]
      %v284 = vld [vmem:[%s219 + $0x38] sm:$0xf]
      %v285 = vld [vmem:[%s219 + $0x3c] sm:$0xf]
      %v286 = vld [vmem:[%s219 + $0x40] sm:$0xf]
      %v287 = vld [vmem:[%s219 + $0x44] sm:$0xf]
      %v288 = vld [vmem:[%s219 + $0x48] sm:$0xf]
      %v289 = vld [vmem:[%s219 + $0x4c] sm:$0xf]
      %v290 = vld [vmem:[%s219 + $0x50] sm:$0xf]
      %v291 = vld [vmem:[%s219 + $0x54] sm:$0xf]
      %v292 = vld [vmem:[%s219 + $0x58] sm:$0xf]
      %v293 = vld [vmem:[%s219 + $0x5c] sm:$0xf]
      %v294 = vld [vmem:[%s219 + $0x60] sm:$0xf]
      %v295 = vld [vmem:[%s219 + $0x64] sm:$0xf]
      %v296 = vld [vmem:[%s219 + $0x68] sm:$0xf]
      %v297 = vld [vmem:[%s219 + $0x6c] sm:$0xf]
      %v298 = vld [vmem:[%s219 + $0x70] sm:$0xf]
      %v299 = vld [vmem:[%s219 + $0x74] sm:$0xf]
      %v300 = vld [vmem:[%s219 + $0x78] sm:$0xf]
      %v301 = vld [vmem:[%s219 + $0x7c] sm:$0xf]
      %v334 = vunpack.c.l.b16 %v270
      %v335 = vunpack.c.l.b16 %v271
      %v336 = vunpack.c.l.b16 %v272
      %v337 = vunpack.c.l.b16 %v273
      %v338 = vunpack.c.l.b16 %v274
      %v339 = vunpack.c.l.b16 %v275
      %v340 = vunpack.c.l.b16 %v276
      %v341 = vunpack.c.l.b16 %v277
      %v342 = vunpack.c.l.b16 %v278
      %v343 = vunpack.c.l.b16 %v279
      %v344 = vunpack.c.l.b16 %v280
      %v345 = vunpack.c.l.b16 %v281
      %v346 = vunpack.c.l.b16 %v282
      %v347 = vunpack.c.l.b16 %v283
      %v348 = vunpack.c.l.b16 %v284
      %v349 = vunpack.c.l.b16 %v285
      %v350 = vunpack.c.l.b16 %v286
      %v351 = vunpack.c.l.b16 %v287
      %v352 = vunpack.c.l.b16 %v288
      %v353 = vunpack.c.l.b16 %v289
      %v354 = vunpack.c.l.b16 %v290
      %v355 = vunpack.c.l.b16 %v291
      %v356 = vunpack.c.l.b16 %v292
      %v357 = vunpack.c.l.b16 %v293
      %v358 = vunpack.c.l.b16 %v294
      %v359 = vunpack.c.l.b16 %v295
      %v360 = vunpack.c.l.b16 %v296
      %v361 = vunpack.c.l.b16 %v297
      %v362 = vunpack.c.l.b16 %v298
      %v363 = vunpack.c.l.b16 %v299
      %v364 = vunpack.c.l.b16 %v300
      %v365 = vunpack.c.l.b16 %v301
      %v366 = vpack.c.b16 %v334, %v334
      %v367 = vpack.c.b16 %v335, %v335
      %v368 = vpack.c.b16 %v336, %v336
      %v369 = vpack.c.b16 %v337, %v337
      %v370 = vpack.c.b16 %v338, %v338
      %v371 = vpack.c.b16 %v339, %v339
      %v372 = vpack.c.b16 %v340, %v340
      %v373 = vpack.c.b16 %v341, %v341
      %v374 = vpack.c.b16 %v342, %v342
      %v375 = vpack.c.b16 %v343, %v343
      %v376 = vpack.c.b16 %v344, %v344
      %v377 = vpack.c.b16 %v345, %v345
      %v378 = vpack.c.b16 %v346, %v346
      %v379 = vpack.c.b16 %v347, %v347
      %v380 = vpack.c.b16 %v348, %v348
      %v381 = vpack.c.b16 %v349, %v349
      %v382 = vpack.c.b16 %v350, %v350
      %v383 = vpack.c.b16 %v351, %v351
      %v384 = vpack.c.b16 %v352, %v352
      %v385 = vpack.c.b16 %v353, %v353
      %v386 = vpack.c.b16 %v354, %v354
      %v387 = vpack.c.b16 %v355, %v355
      %v388 = vpack.c.b16 %v356, %v356
      %v389 = vpack.c.b16 %v357, %v357
      %v390 = vpack.c.b16 %v358, %v358
      %v391 = vpack.c.b16 %v359, %v359
      %v392 = vpack.c.b16 %v360, %v360
      %v393 = vpack.c.b16 %v361, %v361
      %v394 = vpack.c.b16 %v362, %v362
      %v395 = vpack.c.b16 %v363, %v363
      %v396 = vpack.c.b16 %v364, %v364
      %v397 = vpack.c.b16 %v365, %v365
      %s430 = scalar_lea.vmem [#allocation2], 16
      %431 = vst.msk [vmem:[%s430] sm:$0xf0] %vm251, %v366
      %432 = vst.msk [vmem:[%s430 + $0x8] sm:$0xf] %vm232, %v367
      %433 = vst.msk [vmem:[%s430 + $0x10] sm:$0xf0] %vm251, %v368
      %434 = vst.msk [vmem:[%s430 + $0x18] sm:$0xf] %vm232, %v369
      %435 = vst.msk [vmem:[%s430 + $0x20] sm:$0xf0] %vm251, %v370
      %436 = vst.msk [vmem:[%s430 + $0x28] sm:$0xf] %vm232, %v371
      %437 = vst.msk [vmem:[%s430 + $0x30] sm:$0xf0] %vm251, %v372
      %438 = vst.msk [vmem:[%s430 + $0x38] sm:$0xf] %vm232, %v373
      %439 = vst.msk [vmem:[%s430 + $0x40] sm:$0xf0] %vm251, %v374
      %440 = vst.msk [vmem:[%s430 + $0x48] sm:$0xf] %vm232, %v375
      %441 = vst.msk [vmem:[%s430 + $0x50] sm:$0xf0] %vm251, %v376
      %442 = vst.msk [vmem:[%s430 + $0x58] sm:$0xf] %vm232, %v377
      %443 = vst.msk [vmem:[%s430 + $0x60] sm:$0xf0] %vm251, %v378
      %444 = vst.msk [vmem:[%s430 + $0x68] sm:$0xf] %vm232, %v379
      %445 = vst.msk [vmem:[%s430 + $0x70] sm:$0xf0] %vm251, %v380
      %446 = vst.msk [vmem:[%s430 + $0x78] sm:$0xf] %vm232, %v381
      %447 = vst.msk [vmem:[%s430 + $0x80] sm:$0xf0] %vm251, %v382
      %448 = vst.msk [vmem:[%s430 + $0x88] sm:$0xf] %vm232, %v383
      %449 = vst.msk [vmem:[%s430 + $0x90] sm:$0xf0] %vm251, %v384
      %450 = vst.msk [vmem:[%s430 + $0x98] sm:$0xf] %vm232, %v385
      %451 = vst.msk [vmem:[%s430 + $0xa0] sm:$0xf0] %vm251, %v386
      %452 = vst.msk [vmem:[%s430 + $0xa8] sm:$0xf] %vm232, %v387
      %453 = vst.msk [vmem:[%s430 + $0xb0] sm:$0xf0] %vm251, %v388
      %454 = vst.msk [vmem:[%s430 + $0xb8] sm:$0xf] %vm232, %v389
      %455 = vst.msk [vmem:[%s430 + $0xc0] sm:$0xf0] %vm251, %v390
      %456 = vst.msk [vmem:[%s430 + $0xc8] sm:$0xf] %vm232, %v391
      %457 = vst.msk [vmem:[%s430 + $0xd0] sm:$0xf0] %vm251, %v392
      %458 = vst.msk [vmem:[%s430 + $0xd8] sm:$0xf] %vm232, %v393
      %459 = vst.msk [vmem:[%s430 + $0xe0] sm:$0xf0] %vm251, %v394
      %460 = vst.msk [vmem:[%s430 + $0xe8] sm:$0xf] %vm232, %v395
      %461 = vst.msk [vmem:[%s430 + $0xf0] sm:$0xf0] %vm251, %v396
      %462 = vst.msk [vmem:[%s430 + $0xf8] sm:$0xf] %vm232, %v397
      %v463 = vld [vmem:[%s2] sm:$0x1]
      loop: start=0, step=1, limit=2
      $region41: #{attention_refinement_module.1} parent=39 // loop_pre_header
        _
      $region42: #{attention_refinement_module.1} parent=39 // loop_header
        %s465 = sphi 0, %s469
        %p466 = scmp.ge.s32.totalorder %s465, 2
        %v470 = vphi 0.0, %v1473
      $region43: #{attention_refinement_module.1} parent=39 // loop_header_branch
        %468 = sbr.rel (%p466) target = $region47
      $region44: #{attention_refinement_module.1} parent=39 // loop_body
        %s471 = smul.u32 %s465, 8
        %s472 = smul.u32 %s471, 2
        %s473 = smul.addr %s472, 8
        %s474 = scalar_lea.vmem [#allocation2], %s473
        %v475 = vld [vmem:[%s474] sm:$0xff]
        %v476 = vld [vmem:[%s474 + $0x8] sm:$0xff]
        %v477 = vld [vmem:[%s474 + $0x10] sm:$0xff]
        %v478 = vld [vmem:[%s474 + $0x18] sm:$0xff]
        %v479 = vld [vmem:[%s474 + $0x20] sm:$0xff]
        %v480 = vld [vmem:[%s474 + $0x28] sm:$0xff]
        %v481 = vld [vmem:[%s474 + $0x30] sm:$0xff]
        %v482 = vld [vmem:[%s474 + $0x38] sm:$0xff]
        %v483 = vld [vmem:[%s474 + $0x40] sm:$0xff]
        %v484 = vld [vmem:[%s474 + $0x48] sm:$0xff]
        %v485 = vld [vmem:[%s474 + $0x50] sm:$0xff]
        %v486 = vld [vmem:[%s474 + $0x58] sm:$0xff]
        %v487 = vld [vmem:[%s474 + $0x60] sm:$0xff]
        %v488 = vld [vmem:[%s474 + $0x68] sm:$0xff]
        %v489 = vld [vmem:[%s474 + $0x70] sm:$0xff]
        %v490 = vld [vmem:[%s474 + $0x78] sm:$0xff]
        %v491 = vld [vmem:[%s474 + $0x80] sm:$0xff]
        %v492 = vld [vmem:[%s474 + $0x88] sm:$0xff]
        %v493 = vld [vmem:[%s474 + $0x90] sm:$0xff]
        %v494 = vld [vmem:[%s474 + $0x98] sm:$0xff]
        %vm495 = vsmask.f32 7424
        %v497 = vshrl.u32 %v475, 16
        %v499 = vshll.u32 %v475, 16
        %v501 = vrot.slane %v499, 1
        %v502 = vor.u32 %v497, %v501
        %v504 = vshll.u32 %v476, 16
        %v506 = vrot.slane %v504, 1
        %v507 = vsel %vm495, %v502, %v506
        %v508 = vshrl.u32 %v476, 16
        %v510 = vor.u32 %v508, %v506
        %v512 = vshrl.u32 %v477, 16
        %v514 = vshll.u32 %v477, 16
        %v516 = vrot.slane %v514, 1
        %v517 = vor.u32 %v512, %v516
        %v519 = vshll.u32 %v478, 16
        %v521 = vrot.slane %v519, 1
        %v522 = vsel %vm495, %v517, %v521
        %v523 = vshrl.u32 %v478, 16
        %v525 = vor.u32 %v523, %v521
        %v527 = vshrl.u32 %v479, 16
        %v529 = vshll.u32 %v479, 16
        %v531 = vrot.slane %v529, 1
        %v532 = vor.u32 %v527, %v531
        %v534 = vshll.u32 %v480, 16
        %v536 = vrot.slane %v534, 1
        %v537 = vsel %vm495, %v532, %v536
        %v538 = vshrl.u32 %v480, 16
        %v540 = vor.u32 %v538, %v536
        %v542 = vshrl.u32 %v481, 16
        %v544 = vshll.u32 %v481, 16
        %v546 = vrot.slane %v544, 1
        %v547 = vor.u32 %v542, %v546
        %v549 = vshll.u32 %v482, 16
        %v551 = vrot.slane %v549, 1
        %v552 = vsel %vm495, %v547, %v551
        %v553 = vshrl.u32 %v482, 16
        %v555 = vor.u32 %v553, %v551
        %v557 = vshrl.u32 %v483, 16
        %v559 = vshll.u32 %v483, 16
        %v561 = vrot.slane %v559, 1
        %v562 = vor.u32 %v557, %v561
        %v564 = vshll.u32 %v484, 16
        %v566 = vrot.slane %v564, 1
        %v567 = vsel %vm495, %v562, %v566
        %v568 = vshrl.u32 %v484, 16
        %v570 = vor.u32 %v568, %v566
        %v572 = vshrl.u32 %v485, 16
        %v574 = vshll.u32 %v485, 16
        %v576 = vrot.slane %v574, 1
        %v577 = vor.u32 %v572, %v576
        %v579 = vshll.u32 %v486, 16
        %v581 = vrot.slane %v579, 1
        %v582 = vsel %vm495, %v577, %v581
        %v583 = vshrl.u32 %v486, 16
        %v585 = vor.u32 %v583, %v581
        %v587 = vshrl.u32 %v487, 16
        %v589 = vshll.u32 %v487, 16
        %v591 = vrot.slane %v589, 1
        %v592 = vor.u32 %v587, %v591
        %v594 = vshll.u32 %v488, 16
        %v596 = vrot.slane %v594, 1
        %v597 = vsel %vm495, %v592, %v596
        %v598 = vshrl.u32 %v488, 16
        %v600 = vor.u32 %v598, %v596
        %v602 = vshrl.u32 %v489, 16
        %v604 = vshll.u32 %v489, 16
        %v606 = vrot.slane %v604, 1
        %v607 = vor.u32 %v602, %v606
        %v609 = vshll.u32 %v490, 16
        %v611 = vrot.slane %v609, 1
        %v612 = vsel %vm495, %v607, %v611
        %v613 = vshrl.u32 %v490, 16
        %v615 = vor.u32 %v613, %v611
        %v617 = vshrl.u32 %v491, 16
        %v619 = vshll.u32 %v491, 16
        %v621 = vrot.slane %v619, 1
        %v622 = vor.u32 %v617, %v621
        %v624 = vshll.u32 %v492, 16
        %v626 = vrot.slane %v624, 1
        %v627 = vsel %vm495, %v622, %v626
        %v628 = vshrl.u32 %v492, 16
        %v630 = vor.u32 %v628, %v626
        %v632 = vshrl.u32 %v493, 16
        %v634 = vshll.u32 %v493, 16
        %v636 = vrot.slane %v634, 1
        %v637 = vor.u32 %v632, %v636
        %v639 = vshll.u32 %v494, 16
        %v641 = vrot.slane %v639, 1
        %v642 = vsel %vm495, %v637, %v641
        %v643 = vshrl.u32 %v494, 16
        %v645 = vor.u32 %v643, %v641
        %646 = vrot.lane.b32.xlu0 %v507, 4
        %v647 = vpop.permute.xlu0 %646
        %648 = vrot.lane.b32.xlu0 %v510, 4
        %v649 = vpop.permute.xlu0 %648
        %650 = vrot.lane.b32.xlu0 %v522, 4
        %v651 = vpop.permute.xlu0 %650
        %652 = vrot.lane.b32.xlu0 %v525, 4
        %v653 = vpop.permute.xlu0 %652
        %654 = vrot.lane.b32.xlu0 %v537, 4
        %v655 = vpop.permute.xlu0 %654
        %656 = vrot.lane.b32.xlu0 %v540, 4
        %v657 = vpop.permute.xlu0 %656
        %658 = vrot.lane.b32.xlu0 %v552, 4
        %v659 = vpop.permute.xlu0 %658
        %660 = vrot.lane.b32.xlu0 %v555, 4
        %v661 = vpop.permute.xlu0 %660
        %662 = vrot.lane.b32.xlu0 %v567, 4
        %v663 = vpop.permute.xlu0 %662
        %664 = vrot.lane.b32.xlu0 %v570, 4
        %v665 = vpop.permute.xlu0 %664
        %666 = vrot.lane.b32.xlu0 %v582, 4
        %v667 = vpop.permute.xlu0 %666
        %668 = vrot.lane.b32.xlu0 %v585, 4
        %v669 = vpop.permute.xlu0 %668
        %670 = vrot.lane.b32.xlu0 %v597, 4
        %v671 = vpop.permute.xlu0 %670
        %672 = vrot.lane.b32.xlu0 %v600, 4
        %v673 = vpop.permute.xlu0 %672
        %674 = vrot.lane.b32.xlu0 %v612, 4
        %v675 = vpop.permute.xlu0 %674
        %676 = vrot.lane.b32.xlu0 %v615, 4
        %v677 = vpop.permute.xlu0 %676
        %678 = vrot.lane.b32.xlu0 %v627, 4
        %v679 = vpop.permute.xlu0 %678
        %680 = vrot.lane.b32.xlu0 %v630, 4
        %v681 = vpop.permute.xlu0 %680
        %682 = vrot.lane.b32.xlu0 %v642, 4
        %v683 = vpop.permute.xlu0 %682
        %684 = vrot.lane.b32.xlu0 %v645, 4
        %v685 = vpop.permute.xlu0 %684
        %vm706 = vcmask 1046528
        %v707 = vrot.slane %v475, 1
        %v708 = vrot.slane %v476, 1
        %v709 = vsel %vm706, %v707, %v708
        %v710 = vrot.slane %v477, 1
        %v711 = vrot.slane %v478, 1
        %v712 = vsel %vm706, %v710, %v711
        %v713 = vrot.slane %v479, 1
        %v714 = vrot.slane %v480, 1
        %v715 = vsel %vm706, %v713, %v714
        %v716 = vrot.slane %v481, 1
        %v717 = vrot.slane %v482, 1
        %v718 = vsel %vm706, %v716, %v717
        %v719 = vrot.slane %v483, 1
        %v720 = vrot.slane %v484, 1
        %v721 = vsel %vm706, %v719, %v720
        %v722 = vrot.slane %v485, 1
        %v723 = vrot.slane %v486, 1
        %v724 = vsel %vm706, %v722, %v723
        %v725 = vrot.slane %v487, 1
        %v726 = vrot.slane %v488, 1
        %v727 = vsel %vm706, %v725, %v726
        %v728 = vrot.slane %v489, 1
        %v729 = vrot.slane %v490, 1
        %v730 = vsel %vm706, %v728, %v729
        %v731 = vrot.slane %v491, 1
        %v732 = vrot.slane %v492, 1
        %v733 = vsel %vm706, %v731, %v732
        %v734 = vrot.slane %v493, 1
        %v735 = vrot.slane %v494, 1
        %v736 = vsel %vm706, %v734, %v735
        %737 = vrot.lane.b32.xlu0 %v709, 8
        %v738 = vpop.permute.xlu0 %737
        %739 = vrot.lane.b32.xlu0 %v708, 8
        %v740 = vpop.permute.xlu0 %739
        %741 = vrot.lane.b32.xlu0 %v712, 8
        %v742 = vpop.permute.xlu0 %741
        %743 = vrot.lane.b32.xlu0 %v711, 8
        %v744 = vpop.permute.xlu0 %743
        %745 = vrot.lane.b32.xlu0 %v715, 8
        %v746 = vpop.permute.xlu0 %745
        %747 = vrot.lane.b32.xlu0 %v714, 8
        %v748 = vpop.permute.xlu0 %747
        %749 = vrot.lane.b32.xlu0 %v718, 8
        %v750 = vpop.permute.xlu0 %749
        %751 = vrot.lane.b32.xlu0 %v717, 8
        %v752 = vpop.permute.xlu0 %751
        %753 = vrot.lane.b32.xlu0 %v721, 8
        %v754 = vpop.permute.xlu0 %753
        %755 = vrot.lane.b32.xlu0 %v720, 8
        %v756 = vpop.permute.xlu0 %755
        %757 = vrot.lane.b32.xlu0 %v724, 8
        %v758 = vpop.permute.xlu0 %757
        %759 = vrot.lane.b32.xlu0 %v723, 8
        %v760 = vpop.permute.xlu0 %759
        %761 = vrot.lane.b32.xlu0 %v727, 8
        %v762 = vpop.permute.xlu0 %761
        %763 = vrot.lane.b32.xlu0 %v726, 8
        %v764 = vpop.permute.xlu0 %763
        %765 = vrot.lane.b32.xlu0 %v730, 8
        %v766 = vpop.permute.xlu0 %765
        %767 = vrot.lane.b32.xlu0 %v729, 8
        %v768 = vpop.permute.xlu0 %767
        %769 = vrot.lane.b32.xlu0 %v733, 8
        %v770 = vpop.permute.xlu0 %769
        %771 = vrot.lane.b32.xlu0 %v732, 8
        %v772 = vpop.permute.xlu0 %771
        %773 = vrot.lane.b32.xlu0 %v736, 8
        %v774 = vpop.permute.xlu0 %773
        %775 = vrot.lane.b32.xlu0 %v735, 8
        %v776 = vpop.permute.xlu0 %775
        %v778 = vsel %vm226, %v475, %v647
        %v780 = vsel %vm226, %v476, %v649
        %v782 = vsel %vm226, %v477, %v651
        %v784 = vsel %vm226, %v478, %v653
        %v786 = vsel %vm226, %v479, %v655
        %v788 = vsel %vm226, %v480, %v657
        %v790 = vsel %vm226, %v481, %v659
        %v792 = vsel %vm226, %v482, %v661
        %v794 = vsel %vm226, %v483, %v663
        %v796 = vsel %vm226, %v484, %v665
        %v798 = vsel %vm226, %v485, %v667
        %v800 = vsel %vm226, %v486, %v669
        %v802 = vsel %vm226, %v487, %v671
        %v804 = vsel %vm226, %v488, %v673
        %v806 = vsel %vm226, %v489, %v675
        %v808 = vsel %vm226, %v490, %v677
        %v810 = vsel %vm226, %v491, %v679
        %v812 = vsel %vm226, %v492, %v681
        %v814 = vsel %vm226, %v493, %v683
        %v816 = vsel %vm226, %v494, %v685
        %vm817 = vcmask 64512
        %v819 = vsel %vm817, %v778, %v738
        %v821 = vsel %vm817, %v780, %v740
        %v823 = vsel %vm817, %v782, %v742
        %v825 = vsel %vm817, %v784, %v744
        %v827 = vsel %vm817, %v786, %v746
        %v829 = vsel %vm817, %v788, %v748
        %v831 = vsel %vm817, %v790, %v750
        %v833 = vsel %vm817, %v792, %v752
        %v835 = vsel %vm817, %v794, %v754
        %v837 = vsel %vm817, %v796, %v756
        %v839 = vsel %vm817, %v798, %v758
        %v841 = vsel %vm817, %v800, %v760
        %v843 = vsel %vm817, %v802, %v762
        %v845 = vsel %vm817, %v804, %v764
        %v847 = vsel %vm817, %v806, %v766
        %v849 = vsel %vm817, %v808, %v768
        %v851 = vsel %vm817, %v810, %v770
        %v853 = vsel %vm817, %v812, %v772
        %v855 = vsel %vm817, %v814, %v774
        %v857 = vsel %vm817, %v816, %v776
        %vm858 = vsmask.f32 4352
        %v859 = vshrl.u32 %v819, 16
        %v861 = vrot.slane %v859, 3
        %v862 = vshll.u32 %v819, 16
        %v864 = vrot.slane %v862, 4
        %v865 = vor.u32 %v861, %v864
        %v866 = vshrl.u32 %v821, 16
        %v868 = vrot.slane %v866, 3
        %v869 = vshll.u32 %v821, 16
        %v871 = vrot.slane %v869, 4
        %v872 = vor.u32 %v868, %v871
        %v873 = vsel %vm858, %v865, %v872
        %v874 = vshrl.u32 %v823, 16
        %v876 = vrot.slane %v874, 3
        %v877 = vshll.u32 %v823, 16
        %v879 = vrot.slane %v877, 4
        %v880 = vor.u32 %v876, %v879
        %v881 = vshrl.u32 %v825, 16
        %v883 = vrot.slane %v881, 3
        %v884 = vshll.u32 %v825, 16
        %v886 = vrot.slane %v884, 4
        %v887 = vor.u32 %v883, %v886
        %v888 = vsel %vm858, %v880, %v887
        %v889 = vshrl.u32 %v827, 16
        %v891 = vrot.slane %v889, 3
        %v892 = vshll.u32 %v827, 16
        %v894 = vrot.slane %v892, 4
        %v895 = vor.u32 %v891, %v894
        %v896 = vshrl.u32 %v829, 16
        %v898 = vrot.slane %v896, 3
        %v899 = vshll.u32 %v829, 16
        %v901 = vrot.slane %v899, 4
        %v902 = vor.u32 %v898, %v901
        %v903 = vsel %vm858, %v895, %v902
        %v904 = vshrl.u32 %v831, 16
        %v906 = vrot.slane %v904, 3
        %v907 = vshll.u32 %v831, 16
        %v909 = vrot.slane %v907, 4
        %v910 = vor.u32 %v906, %v909
        %v911 = vshrl.u32 %v833, 16
        %v913 = vrot.slane %v911, 3
        %v914 = vshll.u32 %v833, 16
        %v916 = vrot.slane %v914, 4
        %v917 = vor.u32 %v913, %v916
        %v918 = vsel %vm858, %v910, %v917
        %v919 = vshrl.u32 %v835, 16
        %v921 = vrot.slane %v919, 3
        %v922 = vshll.u32 %v835, 16
        %v924 = vrot.slane %v922, 4
        %v925 = vor.u32 %v921, %v924
        %v926 = vshrl.u32 %v837, 16
        %v928 = vrot.slane %v926, 3
        %v929 = vshll.u32 %v837, 16
        %v931 = vrot.slane %v929, 4
        %v932 = vor.u32 %v928, %v931
        %v933 = vsel %vm858, %v925, %v932
        %v934 = vshrl.u32 %v839, 16
        %v936 = vrot.slane %v934, 3
        %v937 = vshll.u32 %v839, 16
        %v939 = vrot.slane %v937, 4
        %v940 = vor.u32 %v936, %v939
        %v941 = vshrl.u32 %v841, 16
        %v943 = vrot.slane %v941, 3
        %v944 = vshll.u32 %v841, 16
        %v946 = vrot.slane %v944, 4
        %v947 = vor.u32 %v943, %v946
        %v948 = vsel %vm858, %v940, %v947
        %v949 = vshrl.u32 %v843, 16
        %v951 = vrot.slane %v949, 3
        %v952 = vshll.u32 %v843, 16
        %v954 = vrot.slane %v952, 4
        %v955 = vor.u32 %v951, %v954
        %v956 = vshrl.u32 %v845, 16
        %v958 = vrot.slane %v956, 3
        %v959 = vshll.u32 %v845, 16
        %v961 = vrot.slane %v959, 4
        %v962 = vor.u32 %v958, %v961
        %v963 = vsel %vm858, %v955, %v962
        %v964 = vshrl.u32 %v847, 16
        %v966 = vrot.slane %v964, 3
        %v967 = vshll.u32 %v847, 16
        %v969 = vrot.slane %v967, 4
        %v970 = vor.u32 %v966, %v969
        %v971 = vshrl.u32 %v849, 16
        %v973 = vrot.slane %v971, 3
        %v974 = vshll.u32 %v849, 16
        %v976 = vrot.slane %v974, 4
        %v977 = vor.u32 %v973, %v976
        %v978 = vsel %vm858, %v970, %v977
        %v979 = vld [vmem:[%s1] sm:$0xf]
        %v980 = vld [vmem:[%s1 + $0x4] sm:$0x3]
        %v981 = vshrl.u32 %v851, 16
        %v983 = vrot.slane %v981, 3
        %v984 = vshll.u32 %v851, 16
        %v986 = vrot.slane %v984, 4
        %v987 = vor.u32 %v983, %v986
        %v988 = vshrl.u32 %v853, 16
        %v990 = vrot.slane %v988, 3
        %v991 = vshll.u32 %v853, 16
        %v993 = vrot.slane %v991, 4
        %v994 = vor.u32 %v990, %v993
        %v995 = vsel %vm858, %v987, %v994
        %s996 = scalar_lea.vmem %s1, 8
        %v997 = vld [vmem:[%s996] sm:$0xf]
        %v998 = vld [vmem:[%s996 + $0x4] sm:$0x3]
        %v1001 = vunpack.c.l.b16 %v997
        %v1002 = vunpack.c.l.b16 %v998
        %v1003 = vpack.c.b16 %v1002, %v1001
        %vm1004 = vcmask 97280
        %v1006 = vsel %vm1004, %v888, 0
        %v1009 = vsel %vm1004, %v903, 0
        %v1012 = vsel %vm1004, %v918, 0
        %v1015 = vsel %vm1004, %v933, 0
        %v1018 = vsel %vm1004, %v948, 0
        %v1021 = vsel %vm1004, %v963, 0
        %v1024 = vsel %vm1004, %v978, 0
        %v1027 = vsel %vm1004, %v995, 0
        %vm1029 = vcmask 1045504
        %v1031 = vsel %vm1029, %v1003, 0
        %1033 = vmatprep.subr.bf16.mxu0 0
        %1034 = vmatpush1.bf16.msra.mxu0 %v1031
        %1035 = vmatprep.subr.bf16.mxu0 0
        %1036 = vmatpush1.bf16.msra.mxu0 0
        %1037 = vmatprep.subr.bf16.mxu0 0
        %1038 = vmatpush1.bf16.msra.mxu0 0
        %1039 = vmatprep.subr.bf16.mxu0 0
        %1040 = vmatpush1.bf16.msra.mxu0 0
        %1041 = vmatprep.subr.bf16.mxu0 0
        %1042 = vmatpush1.bf16.msra.mxu0 0
        %1043 = vmatprep.subr.bf16.mxu0 0
        %1044 = vmatpush1.bf16.msra.mxu0 0
        %1045 = vmatprep.subr.bf16.mxu0 0
        %1046 = vmatpush1.bf16.msra.mxu0 0
        %1047 = vmatprep.subr.bf16.mxu0 0
        %1048 = vmatpush1.bf16.msra.mxu0 0
        %1049 = vmatprep.subr.bf16.mxu0 0
        %1050 = vmatpush1.bf16.msra.mxu0 0
        %1051 = vmatprep.subr.bf16.mxu0 0
        %1052 = vmatpush1.bf16.msra.mxu0 0
        %1053 = vmatprep.subr.bf16.mxu0 0
        %1054 = vmatpush1.bf16.msra.mxu0 0
        %1055 = vmatprep.subr.bf16.mxu0 0
        %1056 = vmatpush1.bf16.msra.mxu0 0
        %1057 = vmatprep.subr.bf16.mxu0 0
        %1058 = vmatpush1.bf16.msra.mxu0 0
        %1059 = vmatprep.subr.bf16.mxu0 0
        %1060 = vmatpush1.bf16.msra.mxu0 0
        %1061 = vmatprep.subr.bf16.mxu0 0
        %1062 = vmatpush1.bf16.msra.mxu0 0
        %1063 = vmatprep.subr.bf16.mxu0 0
        %1064 = vmatpush1.bf16.msra.mxu0 0
        %1065 = vmatprep.mubr.bf16.mxu0 0
        %1066 = vmatmul.mubr.bf16.gmra.mrb[0].mxu0 %v1006
        %v1067 = vpop.f32.mrb[0].mxu0
        %v1068 = vadd.f32 0.0, %v1067
        %v1069 = vpop.f32.mrb[0].mxu0
        %v1070 = vpop.f32.mrb[0].mxu0
        %v1071 = vadd.f32 0.0, %v1070
        %v1072 = vpop.f32.mrb[0].mxu0
        %1073 = vmatprep.mubr.bf16.mxu0 0
        %1074 = vmatmul.mubr.bf16.gmra.mrb[0].mxu0 %v1009
        %v1075 = vpop.f32.mrb[0].mxu0
        %v1076 = vadd.f32 0.0, %v1075
        %v1077 = vpop.f32.mrb[0].mxu0
        %v1078 = vpop.f32.mrb[0].mxu0
        %v1079 = vadd.f32 0.0, %v1078
        %v1080 = vpop.f32.mrb[0].mxu0
        %1081 = vmatprep.mubr.bf16.mxu0 0
        %1082 = vmatmul.mubr.bf16.gmra.mrb[0].mxu0 %v1012
        %v1083 = vpop.f32.mrb[0].mxu0
        %v1084 = vadd.f32 0.0, %v1083
        %v1085 = vpop.f32.mrb[0].mxu0
        %v1086 = vpop.f32.mrb[0].mxu0
        %v1087 = vadd.f32 0.0, %v1086
        %v1088 = vpop.f32.mrb[0].mxu0
        %1089 = vmatprep.mubr.bf16.mxu0 0
        %1090 = vmatmul.mubr.bf16.gmra.mrb[0].mxu0 %v1015
        %v1091 = vpop.f32.mrb[0].mxu0
        %v1092 = vadd.f32 0.0, %v1091
        %v1093 = vpop.f32.mrb[0].mxu0
        %v1094 = vpop.f32.mrb[0].mxu0
        %v1095 = vadd.f32 0.0, %v1094
        %v1096 = vpop.f32.mrb[0].mxu0
        %1097 = vmatprep.mubr.bf16.mxu0 0
        %1098 = vmatmul.mubr.bf16.gmra.mrb[0].mxu0 %v1018
        %v1099 = vpop.f32.mrb[0].mxu0
        %v1100 = vadd.f32 0.0, %v1099
        %v1101 = vpop.f32.mrb[0].mxu0
        %v1102 = vpop.f32.mrb[0].mxu0
        %v1103 = vadd.f32 0.0, %v1102
        %v1104 = vpop.f32.mrb[0].mxu0
        %1105 = vmatprep.mubr.bf16.mxu0 0
        %1106 = vmatmul.mubr.bf16.gmra.mrb[0].mxu0 %v1021
        %v1107 = vpop.f32.mrb[0].mxu0
        %v1108 = vadd.f32 0.0, %v1107
        %v1109 = vpop.f32.mrb[0].mxu0
        %v1110 = vpop.f32.mrb[0].mxu0
        %v1111 = vadd.f32 0.0, %v1110
        %v1112 = vpop.f32.mrb[0].mxu0
        %1113 = vmatprep.mubr.bf16.mxu0 0
        %1114 = vmatmul.mubr.bf16.gmra.mrb[0].mxu0 %v1024
        %v1115 = vpop.f32.mrb[0].mxu0
        %v1116 = vadd.f32 0.0, %v1115
        %v1117 = vpop.f32.mrb[0].mxu0
        %v1118 = vpop.f32.mrb[0].mxu0
        %v1119 = vadd.f32 0.0, %v1118
        %v1120 = vpop.f32.mrb[0].mxu0
        %1121 = vmatprep.mubr.bf16.mxu0 0
        %1122 = vmatmul.mubr.bf16.gmra.mrb[0].mxu0 %v1027
        %v1123 = vpop.f32.mrb[0].mxu0
        %v1124 = vadd.f32 0.0, %v1123
        %v1125 = vpop.f32.mrb[0].mxu0
        %v1126 = vpop.f32.mrb[0].mxu0
        %v1127 = vadd.f32 0.0, %v1126
        %v1128 = vpop.f32.mrb[0].mxu0
        %1129 = vdwg.mxu0
        %v1132 = vunpack.c.l.b16 %v979
        %v1133 = vunpack.c.l.b16 %v980
        %v1134 = vpack.c.b16 %v1133, %v1132
        %v1136 = vsel %vm1004, %v873, 0
        %v1139 = vsel %vm1029, %v1134, 0
        %1141 = vmatprep.subr.bf16.mxu0 0
        %1142 = vmatpush1.bf16.msra.mxu0 %v1139
        %1143 = vmatprep.subr.bf16.mxu0 0
        %1144 = vmatpush1.bf16.msra.mxu0 0
        %1145 = vmatprep.subr.bf16.mxu0 0
        %1146 = vmatpush1.bf16.msra.mxu0 0
        %1147 = vmatprep.subr.bf16.mxu0 0
        %1148 = vmatpush1.bf16.msra.mxu0 0
        %1149 = vmatprep.subr.bf16.mxu0 0
        %1150 = vmatpush1.bf16.msra.mxu0 0
        %1151 = vmatprep.subr.bf16.mxu0 0
        %1152 = vmatpush1.bf16.msra.mxu0 0
        %1153 = vmatprep.subr.bf16.mxu0 0
        %1154 = vmatpush1.bf16.msra.mxu0 0
        %1155 = vmatprep.subr.bf16.mxu0 0
        %1156 = vmatpush1.bf16.msra.mxu0 0
        %1157 = vmatprep.subr.bf16.mxu0 0
        %1158 = vmatpush1.bf16.msra.mxu0 0
        %1159 = vmatprep.subr.bf16.mxu0 0
        %1160 = vmatpush1.bf16.msra.mxu0 0
        %1161 = vmatprep.subr.bf16.mxu0 0
        %1162 = vmatpush1.bf16.msra.mxu0 0
        %1163 = vmatprep.subr.bf16.mxu0 0
        %1164 = vmatpush1.bf16.msra.mxu0 0
        %1165 = vmatprep.subr.bf16.mxu0 0
        %1166 = vmatpush1.bf16.msra.mxu0 0
        %1167 = vmatprep.subr.bf16.mxu0 0
        %1168 = vmatpush1.bf16.msra.mxu0 0
        %1169 = vmatprep.subr.bf16.mxu0 0
        %1170 = vmatpush1.bf16.msra.mxu0 0
        %1171 = vmatprep.subr.bf16.mxu0 0
        %1172 = vmatpush1.bf16.msra.mxu0 0
        %1173 = vmatprep.mubr.bf16.mxu0 0
        %1174 = vmatmul.mubr.bf16.gmra.mrb[0].mxu0 %v1136
        %v1175 = vpop.f32.mrb[0].mxu0
        %v1176 = vadd.f32 %v1068, %v1175
        %v1177 = vpop.f32.mrb[0].mxu0
        %v1178 = vpop.f32.mrb[0].mxu0
        %v1179 = vadd.f32 %v1071, %v1178
        %v1180 = vpop.f32.mrb[0].mxu0
        %1181 = vmatprep.mubr.bf16.mxu0 0
        %1182 = vmatmul.mubr.bf16.gmra.mrb[0].mxu0 %v1006
        %v1183 = vpop.f32.mrb[0].mxu0
        %v1184 = vadd.f32 %v1076, %v1183
        %v1185 = vpop.f32.mrb[0].mxu0
        %v1186 = vpop.f32.mrb[0].mxu0
        %v1187 = vadd.f32 %v1079, %v1186
        %v1188 = vpop.f32.mrb[0].mxu0
        %1189 = vmatprep.mubr.bf16.mxu0 0
        %1190 = vmatmul.mubr.bf16.gmra.mrb[0].mxu0 %v1009
        %v1191 = vpop.f32.mrb[0].mxu0
        %v1192 = vadd.f32 %v1084, %v1191
        %v1193 = vpop.f32.mrb[0].mxu0
        %v1194 = vpop.f32.mrb[0].mxu0
        %v1195 = vadd.f32 %v1087, %v1194
        %v1196 = vpop.f32.mrb[0].mxu0
        %1197 = vmatprep.mubr.bf16.mxu0 0
        %1198 = vmatmul.mubr.bf16.gmra.mrb[0].mxu0 %v1012
        %v1199 = vpop.f32.mrb[0].mxu0
        %v1200 = vadd.f32 %v1092, %v1199
        %v1201 = vpop.f32.mrb[0].mxu0
        %v1202 = vpop.f32.mrb[0].mxu0
        %v1203 = vadd.f32 %v1095, %v1202
        %v1204 = vpop.f32.mrb[0].mxu0
        %1205 = vmatprep.mubr.bf16.mxu0 0
        %1206 = vmatmul.mubr.bf16.gmra.mrb[0].mxu0 %v1015
        %v1207 = vpop.f32.mrb[0].mxu0
        %v1208 = vadd.f32 %v1100, %v1207
        %v1209 = vpop.f32.mrb[0].mxu0
        %v1210 = vpop.f32.mrb[0].mxu0
        %v1211 = vadd.f32 %v1103, %v1210
        %v1212 = vpop.f32.mrb[0].mxu0
        %1213 = vmatprep.mubr.bf16.mxu0 0
        %1214 = vmatmul.mubr.bf16.gmra.mrb[0].mxu0 %v1018
        %v1215 = vpop.f32.mrb[0].mxu0
        %v1216 = vadd.f32 %v1108, %v1215
        %v1217 = vpop.f32.mrb[0].mxu0
        %v1218 = vpop.f32.mrb[0].mxu0
        %v1219 = vadd.f32 %v1111, %v1218
        %v1220 = vpop.f32.mrb[0].mxu0
        %1221 = vmatprep.mubr.bf16.mxu0 0
        %1222 = vmatmul.mubr.bf16.gmra.mrb[0].mxu0 %v1021
        %v1223 = vpop.f32.mrb[0].mxu0
        %v1224 = vadd.f32 %v1116, %v1223
        %v1225 = vpop.f32.mrb[0].mxu0
        %v1226 = vpop.f32.mrb[0].mxu0
        %v1227 = vadd.f32 %v1119, %v1226
        %v1228 = vpop.f32.mrb[0].mxu0
        %1229 = vmatprep.mubr.bf16.mxu0 0
        %1230 = vmatmul.mubr.bf16.gmra.mrb[0].mxu0 %v1024
        %v1231 = vpop.f32.mrb[0].mxu0
        %v1232 = vadd.f32 %v1124, %v1231
        %v1233 = vpop.f32.mrb[0].mxu0
        %v1234 = vpop.f32.mrb[0].mxu0
        %v1235 = vadd.f32 %v1127, %v1234
        %v1236 = vpop.f32.mrb[0].mxu0
        %1237 = vdwg.mxu0
        %v1238 = vshrl.u32 %v855, 16
        %v1240 = vrot.slane %v1238, 3
        %v1241 = vshll.u32 %v855, 16
        %v1243 = vrot.slane %v1241, 4
        %v1244 = vor.u32 %v1240, %v1243
        %v1245 = vshrl.u32 %v857, 16
        %v1247 = vrot.slane %v1245, 3
        %v1248 = vshll.u32 %v857, 16
        %v1250 = vrot.slane %v1248, 4
        %v1251 = vor.u32 %v1247, %v1250
        %v1252 = vsel %vm858, %v1244, %v1251
        %s1253 = scalar_lea.vmem %s1, 16
        %v1254 = vld [vmem:[%s1253] sm:$0xf]
        %v1255 = vld [vmem:[%s1253 + $0x4] sm:$0x3]
        %v1258 = vunpack.c.l.b16 %v1254
        %v1259 = vunpack.c.l.b16 %v1255
        %v1260 = vpack.c.b16 %v1259, %v1258
        %v1262 = vsel %vm1004, %v1252, 0
        %v1265 = vsel %vm1029, %v1260, 0
        %1267 = vmatprep.subr.bf16.mxu0 0
        %1268 = vmatpush1.bf16.msra.mxu0 %v1265
        %1269 = vmatprep.subr.bf16.mxu0 0
        %1270 = vmatpush1.bf16.msra.mxu0 0
        %1271 = vmatprep.subr.bf16.mxu0 0
        %1272 = vmatpush1.bf16.msra.mxu0 0
        %1273 = vmatprep.subr.bf16.mxu0 0
        %1274 = vmatpush1.bf16.msra.mxu0 0
        %1275 = vmatprep.subr.bf16.mxu0 0
        %1276 = vmatpush1.bf16.msra.mxu0 0
        %1277 = vmatprep.subr.bf16.mxu0 0
        %1278 = vmatpush1.bf16.msra.mxu0 0
        %1279 = vmatprep.subr.bf16.mxu0 0
        %1280 = vmatpush1.bf16.msra.mxu0 0
        %1281 = vmatprep.subr.bf16.mxu0 0
        %1282 = vmatpush1.bf16.msra.mxu0 0
        %1283 = vmatprep.subr.bf16.mxu0 0
        %1284 = vmatpush1.bf16.msra.mxu0 0
        %1285 = vmatprep.subr.bf16.mxu0 0
        %1286 = vmatpush1.bf16.msra.mxu0 0
        %1287 = vmatprep.subr.bf16.mxu0 0
        %1288 = vmatpush1.bf16.msra.mxu0 0
        %1289 = vmatprep.subr.bf16.mxu0 0
        %1290 = vmatpush1.bf16.msra.mxu0 0
        %1291 = vmatprep.subr.bf16.mxu0 0
        %1292 = vmatpush1.bf16.msra.mxu0 0
        %1293 = vmatprep.subr.bf16.mxu0 0
        %1294 = vmatpush1.bf16.msra.mxu0 0
        %1295 = vmatprep.subr.bf16.mxu0 0
        %1296 = vmatpush1.bf16.msra.mxu0 0
        %1297 = vmatprep.subr.bf16.mxu0 0
        %1298 = vmatpush1.bf16.msra.mxu0 0
        %1299 = vmatprep.mubr.bf16.mxu0 0
        %1300 = vmatmul.mubr.bf16.gmra.mrb[0].mxu0 %v1009
        %v1301 = vpop.f32.mrb[0].mxu0
        %v1302 = vadd.f32 0.0, %v1301
        %v1303 = vpop.f32.mrb[0].mxu0
        %v1304 = vpop.f32.mrb[0].mxu0
        %v1305 = vadd.f32 0.0, %v1304
        %v1306 = vpop.f32.mrb[0].mxu0
        %1307 = vmatprep.mubr.bf16.mxu0 0
        %1308 = vmatmul.mubr.bf16.gmra.mrb[0].mxu0 %v1012
        %v1309 = vpop.f32.mrb[0].mxu0
        %v1310 = vadd.f32 0.0, %v1309
        %v1311 = vpop.f32.mrb[0].mxu0
        %v1312 = vpop.f32.mrb[0].mxu0
        %v1313 = vadd.f32 0.0, %v1312
        %v1314 = vpop.f32.mrb[0].mxu0
        %1315 = vmatprep.mubr.bf16.mxu0 0
        %1316 = vmatmul.mubr.bf16.gmra.mrb[0].mxu0 %v1015
        %v1317 = vpop.f32.mrb[0].mxu0
        %v1318 = vadd.f32 0.0, %v1317
        %v1319 = vpop.f32.mrb[0].mxu0
        %v1320 = vpop.f32.mrb[0].mxu0
        %v1321 = vadd.f32 0.0, %v1320
        %v1322 = vpop.f32.mrb[0].mxu0
        %1323 = vmatprep.mubr.bf16.mxu0 0
        %1324 = vmatmul.mubr.bf16.gmra.mrb[0].mxu0 %v1018
        %v1325 = vpop.f32.mrb[0].mxu0
        %v1326 = vadd.f32 0.0, %v1325
        %v1327 = vpop.f32.mrb[0].mxu0
        %v1328 = vpop.f32.mrb[0].mxu0
        %v1329 = vadd.f32 0.0, %v1328
        %v1330 = vpop.f32.mrb[0].mxu0
        %1331 = vmatprep.mubr.bf16.mxu0 0
        %1332 = vmatmul.mubr.bf16.gmra.mrb[0].mxu0 %v1021
        %v1333 = vpop.f32.mrb[0].mxu0
        %v1334 = vadd.f32 0.0, %v1333
        %v1335 = vpop.f32.mrb[0].mxu0
        %v1336 = vpop.f32.mrb[0].mxu0
        %v1337 = vadd.f32 0.0, %v1336
        %v1338 = vpop.f32.mrb[0].mxu0
        %1339 = vmatprep.mubr.bf16.mxu0 0
        %1340 = vmatmul.mubr.bf16.gmra.mrb[0].mxu0 %v1024
        %v1341 = vpop.f32.mrb[0].mxu0
        %v1342 = vadd.f32 0.0, %v1341
        %v1343 = vpop.f32.mrb[0].mxu0
        %v1344 = vpop.f32.mrb[0].mxu0
        %v1345 = vadd.f32 0.0, %v1344
        %v1346 = vpop.f32.mrb[0].mxu0
        %1347 = vmatprep.mubr.bf16.mxu0 0
        %1348 = vmatmul.mubr.bf16.gmra.mrb[0].mxu0 %v1027
        %v1349 = vpop.f32.mrb[0].mxu0
        %v1350 = vadd.f32 0.0, %v1349
        %v1351 = vpop.f32.mrb[0].mxu0
        %v1352 = vpop.f32.mrb[0].mxu0
        %v1353 = vadd.f32 0.0, %v1352
        %v1354 = vpop.f32.mrb[0].mxu0
        %1355 = vmatprep.mubr.bf16.mxu0 0
        %1356 = vmatmul.mubr.bf16.gmra.mrb[0].mxu0 %v1262
        %v1357 = vpop.f32.mrb[0].mxu0
        %v1358 = vadd.f32 0.0, %v1357
        %v1359 = vpop.f32.mrb[0].mxu0
        %v1360 = vpop.f32.mrb[0].mxu0
        %v1361 = vadd.f32 0.0, %v1360
        %v1362 = vpop.f32.mrb[0].mxu0
        %1363 = vdwg.mxu0
        %v1364 = vadd.f32 %v1176, %v1302
        %v1365 = vadd.f32 %v1179, %v1305
        %v1366 = vadd.f32 %v1184, %v1310
        %v1367 = vadd.f32 %v1187, %v1313
        %v1368 = vadd.f32 %v1192, %v1318
        %v1369 = vadd.f32 %v1195, %v1321
        %v1370 = vadd.f32 %v1200, %v1326
        %v1371 = vadd.f32 %v1203, %v1329
        %v1372 = vadd.f32 %v1208, %v1334
        %v1373 = vadd.f32 %v1211, %v1337
        %v1374 = vadd.f32 %v1216, %v1342
        %v1375 = vadd.f32 %v1219, %v1345
        %v1376 = vadd.f32 %v1224, %v1350
        %v1377 = vadd.f32 %v1227, %v1353
        %v1378 = vadd.f32 %v1232, %v1358
        %v1379 = vadd.f32 %v1235, %v1361
        %v1381 = vlaneseq
        %v1382 = vshrl.u32 %v1381, 7
        %v1383 = vsub.s32 0, %v1382
        %v1384 = vrot.slane %v463, %v1383
        %v1386 = vadd.f32 %v1364, %v1384
        %v1387 = vadd.f32 %v1365, %v1384
        %v1388 = vadd.f32 %v1366, %v1384
        %v1389 = vadd.f32 %v1367, %v1384
        %v1390 = vadd.f32 %v1368, %v1384
        %v1391 = vadd.f32 %v1369, %v1384
        %v1392 = vadd.f32 %v1370, %v1384
        %v1393 = vadd.f32 %v1371, %v1384
        %v1394 = vadd.f32 %v1372, %v1384
        %v1395 = vadd.f32 %v1373, %v1384
        %v1396 = vadd.f32 %v1374, %v1384
        %v1397 = vadd.f32 %v1375, %v1384
        %v1398 = vadd.f32 %v1376, %v1384
        %v1399 = vadd.f32 %v1377, %v1384
        %v1400 = vadd.f32 %v1378, %v1384
        %v1401 = vadd.f32 %v1379, %v1384
        %v1402 = vmax.f32 %v1386, 0.0
        %v1403 = vmax.f32 %v1387, 0.0
        %v1404 = vmax.f32 %v1388, 0.0
        %v1405 = vmax.f32 %v1389, 0.0
        %v1406 = vmax.f32 %v1390, 0.0
        %v1407 = vmax.f32 %v1391, 0.0
        %v1408 = vmax.f32 %v1392, 0.0
        %v1409 = vmax.f32 %v1393, 0.0
        %v1410 = vmax.f32 %v1394, 0.0
        %v1411 = vmax.f32 %v1395, 0.0
        %v1412 = vmax.f32 %v1396, 0.0
        %v1413 = vmax.f32 %v1397, 0.0
        %v1414 = vmax.f32 %v1398, 0.0
        %v1415 = vmax.f32 %v1399, 0.0
        %v1416 = vmax.f32 %v1400, 0.0
        %v1417 = vmax.f32 %v1401, 0.0
        %s1418 = smul.u32 %s471, 16
        %s1419 = scalar_lea.vmem %s224, %s1418
        %1420 = vst.msk [vmem:[%s1419] sm:$0xff] %vm817, %v1402
        %1421 = vst.msk [vmem:[%s1419 + $0x8] sm:$0xff] %vm817, %v1403
        %1422 = vst.msk [vmem:[%s1419 + $0x10] sm:$0xff] %vm817, %v1404
        %1423 = vst.msk [vmem:[%s1419 + $0x18] sm:$0xff] %vm817, %v1405
        %1424 = vst.msk [vmem:[%s1419 + $0x20] sm:$0xff] %vm817, %v1406
        %1425 = vst.msk [vmem:[%s1419 + $0x28] sm:$0xff] %vm817, %v1407
        %1426 = vst.msk [vmem:[%s1419 + $0x30] sm:$0xff] %vm817, %v1408
        %1427 = vst.msk [vmem:[%s1419 + $0x38] sm:$0xff] %vm817, %v1409
        %1428 = vst.msk [vmem:[%s1419 + $0x40] sm:$0xff] %vm817, %v1410
        %1429 = vst.msk [vmem:[%s1419 + $0x48] sm:$0xff] %vm817, %v1411
        %1430 = vst.msk [vmem:[%s1419 + $0x50] sm:$0xff] %vm817, %v1412
        %1431 = vst.msk [vmem:[%s1419 + $0x58] sm:$0xff] %vm817, %v1413
        %1432 = vst.msk [vmem:[%s1419 + $0x60] sm:$0xff] %vm817, %v1414
        %1433 = vst.msk [vmem:[%s1419 + $0x68] sm:$0xff] %vm817, %v1415
        %1434 = vst.msk [vmem:[%s1419 + $0x70] sm:$0xff] %vm817, %v1416
        %1435 = vst.msk [vmem:[%s1419 + $0x78] sm:$0xff] %vm817, %v1417
        %v1436 = vsel %vm817, %v1402, 0.0
        %v1437 = vsel %vm817, %v1403, 0.0
        %v1438 = vadd.f32 %v1436, %v1437
        %v1439 = vsel %vm817, %v1404, 0.0
        %v1440 = vadd.f32 %v1438, %v1439
        %v1441 = vsel %vm817, %v1405, 0.0
        %v1442 = vadd.f32 %v1440, %v1441
        %v1443 = vsel %vm817, %v1406, 0.0
        %v1444 = vadd.f32 %v1442, %v1443
        %v1445 = vsel %vm817, %v1407, 0.0
        %v1446 = vadd.f32 %v1444, %v1445
        %v1447 = vsel %vm817, %v1408, 0.0
        %v1448 = vadd.f32 %v1446, %v1447
        %v1449 = vsel %vm817, %v1409, 0.0
        %v1450 = vadd.f32 %v1448, %v1449
        %v1451 = vsel %vm817, %v1410, 0.0
        %v1452 = vadd.f32 %v1450, %v1451
        %v1453 = vsel %vm817, %v1411, 0.0
        %v1454 = vadd.f32 %v1452, %v1453
        %v1455 = vsel %vm817, %v1412, 0.0
        %v1456 = vadd.f32 %v1454, %v1455
        %v1457 = vsel %vm817, %v1413, 0.0
        %v1458 = vadd.f32 %v1456, %v1457
        %v1459 = vsel %vm817, %v1414, 0.0
        %v1460 = vadd.f32 %v1458, %v1459
        %v1461 = vsel %vm817, %v1415, 0.0
        %v1462 = vadd.f32 %v1460, %v1461
        %v1463 = vsel %vm817, %v1416, 0.0
        %v1464 = vadd.f32 %v1462, %v1463
        %v1465 = vsel %vm817, %v1417, 0.0
        %v1466 = vadd.f32 %v1464, %v1465
        %v1467 = vrot.slane %v1466, 4
        %v1468 = vadd.f32 %v1466, %v1467
        %v1469 = vrot.slane %v1468, 2
        %v1470 = vadd.f32 %v1468, %v1469
        %v1471 = vrot.slane %v1470, 1
        %v1472 = vadd.f32 %v1470, %v1471
        %v1473 = vadd.f32 %v470, %v1472
      $region45: #{attention_refinement_module.1} parent=39 // loop_footer
        %s469 = sadd.s32 1, %s465
      $region46: #{attention_refinement_module.1} parent=39 // loop_footer_branch
        %464 = sbr.rel target = $region42
      $region47: #{attention_refinement_module.1} parent=39 // loop_exit
        _
      %v1474 = vmul.f32 %v470, 0.00390625
      %v1475 = vld [vmem:[%s3] sm:$0xff]
      %v1476 = vld [vmem:[%s4] sm:$0x1]
      %vm1477 = vcmask 64512
      %v1479 = vsel %vm1477, %v1474, 0
      %1481 = vmatprep.subr.mxu0 0.0
      %1482 = vmatpush1.msra.mxu0 %v1475
      %1483 = vmatprep.subr.mxu0 0.0
      %1484 = vmatpush1.msra.mxu0 0.0
      %1485 = vmatprep.subr.mxu0 0.0
      %1486 = vmatpush1.msra.mxu0 0.0
      %1487 = vmatprep.subr.mxu0 0.0
      %1488 = vmatpush1.msra.mxu0 0.0
      %1489 = vmatprep.subr.mxu0 0.0
      %1490 = vmatpush1.msra.mxu0 0.0
      %1491 = vmatprep.subr.mxu0 0.0
      %1492 = vmatpush1.msra.mxu0 0.0
      %1493 = vmatprep.subr.mxu0 0.0
      %1494 = vmatpush1.msra.mxu0 0.0
      %1495 = vmatprep.subr.mxu0 0.0
      %1496 = vmatpush1.msra.mxu0 0.0
      %1497 = vmatprep.subr.mxu0 0.0
      %1498 = vmatpush1.msra.mxu0 0.0
      %1499 = vmatprep.subr.mxu0 0.0
      %1500 = vmatpush1.msra.mxu0 0.0
      %1501 = vmatprep.subr.mxu0 0.0
      %1502 = vmatpush1.msra.mxu0 0.0
      %1503 = vmatprep.subr.mxu0 0.0
      %1504 = vmatpush1.msra.mxu0 0.0
      %1505 = vmatprep.subr.mxu0 0.0
      %1506 = vmatpush1.msra.mxu0 0.0
      %1507 = vmatprep.subr.mxu0 0.0
      %1508 = vmatpush1.msra.mxu0 0.0
      %1509 = vmatprep.subr.mxu0 0.0
      %1510 = vmatpush1.msra.mxu0 0.0
      %1511 = vmatprep.subr.mxu0 0.0
      %1512 = vmatpush1.msra.mxu0 0.0
      %1513 = vmatprep.subr.mxu0 0.0
      %1514 = vmatpush1.msra.mxu0 0.0
      %1515 = vmatprep.subr.mxu0 0.0
      %1516 = vmatpush1.msra.mxu0 0.0
      %1517 = vmatprep.subr.mxu0 0.0
      %1518 = vmatpush1.msra.mxu0 0.0
      %1519 = vmatprep.subr.mxu0 0.0
      %1520 = vmatpush1.msra.mxu0 0.0
      %1521 = vmatprep.subr.mxu0 0.0
      %1522 = vmatpush1.msra.mxu0 0.0
      %1523 = vmatprep.subr.mxu0 0.0
      %1524 = vmatpush1.msra.mxu0 0.0
      %1525 = vmatprep.subr.mxu0 0.0
      %1526 = vmatpush1.msra.mxu0 0.0
      %1527 = vmatprep.subr.mxu0 0.0
      %1528 = vmatpush1.msra.mxu0 0.0
      %1529 = vmatprep.subr.mxu0 0.0
      %1530 = vmatpush1.msra.mxu0 0.0
      %1531 = vmatprep.subr.mxu0 0.0
      %1532 = vmatpush1.msra.mxu0 0.0
      %1533 = vmatprep.subr.mxu0 0.0
      %1534 = vmatpush1.msra.mxu0 0.0
      %1535 = vmatprep.subr.mxu0 0.0
      %1536 = vmatpush1.msra.mxu0 0.0
      %1537 = vmatprep.subr.mxu0 0.0
      %1538 = vmatpush1.msra.mxu0 0.0
      %1539 = vmatprep.subr.mxu0 0.0
      %1540 = vmatpush1.msra.mxu0 0.0
      %1541 = vmatprep.subr.mxu0 0.0
      %1542 = vmatpush1.msra.mxu0 0.0
      %1543 = vmatprep.subr.mxu0 0.0
      %1544 = vmatpush1.msra.mxu0 0.0
      %1545 = vmatprep.mubr.f32.mxu0 0.0
      %1546 = vmatmul.mubr.f32.gmra.mrb[0].mxu0 %v1479
      %v1547 = vpop.f32.mrb[0].mxu0
      %v1548 = vadd.f32 %v1476, %v1547
      %v1549 = vpop.f32.mrb[0].mxu0
      %1550 = vdwg.mxu0
      %v1551 = vxor.u32 %v1548, 2147483648
      %v1552 = vmul.f32 %v1551, 1.442695
      %v1553 = vpow.pop %v1552
      %v1554 = vadd.f32 %v1553, 1.0
      %v1555 = vrcp.pop %v1554
      %v1556 = vmul.f32 1.0, %v1555
      %v1557 = vld [vmem:[%s224] sm:$0xff]
      %v1558 = vld [vmem:[%s224 + $0x8] sm:$0xff]
      %v1559 = vld [vmem:[%s224 + $0x10] sm:$0xff]
      %v1560 = vld [vmem:[%s224 + $0x18] sm:$0xff]
      %v1561 = vld [vmem:[%s224 + $0x20] sm:$0xff]
      %v1562 = vld [vmem:[%s224 + $0x28] sm:$0xff]
      %v1563 = vld [vmem:[%s224 + $0x30] sm:$0xff]
      %v1564 = vld [vmem:[%s224 + $0x38] sm:$0xff]
      %v1565 = vld [vmem:[%s224 + $0x40] sm:$0xff]
      %v1566 = vld [vmem:[%s224 + $0x48] sm:$0xff]
      %v1567 = vld [vmem:[%s224 + $0x50] sm:$0xff]
      %v1568 = vld [vmem:[%s224 + $0x58] sm:$0xff]
      %v1569 = vld [vmem:[%s224 + $0x60] sm:$0xff]
      %v1570 = vld [vmem:[%s224 + $0x68] sm:$0xff]
      %v1571 = vld [vmem:[%s224 + $0x70] sm:$0xff]
      %v1572 = vld [vmem:[%s224 + $0x78] sm:$0xff]
      %v1573 = vld [vmem:[%s224 + $0x80] sm:$0xff]
      %v1574 = vld [vmem:[%s224 + $0x88] sm:$0xff]
      %v1575 = vld [vmem:[%s224 + $0x90] sm:$0xff]
      %v1576 = vld [vmem:[%s224 + $0x98] sm:$0xff]
      %v1577 = vld [vmem:[%s224 + $0xa0] sm:$0xff]
      %v1578 = vld [vmem:[%s224 + $0xa8] sm:$0xff]
      %v1579 = vld [vmem:[%s224 + $0xb0] sm:$0xff]
      %v1580 = vld [vmem:[%s224 + $0xb8] sm:$0xff]
      %v1581 = vld [vmem:[%s224 + $0xc0] sm:$0xff]
      %v1582 = vld [vmem:[%s224 + $0xc8] sm:$0xff]
      %v1583 = vld [vmem:[%s224 + $0xd0] sm:$0xff]
      %v1584 = vld [vmem:[%s224 + $0xd8] sm:$0xff]
      %v1585 = vld [vmem:[%s224 + $0xe0] sm:$0xff]
      %v1586 = vld [vmem:[%s224 + $0xe8] sm:$0xff]
      %v1587 = vld [vmem:[%s224 + $0xf0] sm:$0xff]
      %v1588 = vld [vmem:[%s224 + $0xf8] sm:$0xff]
      %v1589 = vlaneseq
      %v1590 = vshrl.u32 %v1589, 7
      %v1591 = vsub.s32 0, %v1590
      %v1592 = vrot.slane %v1556, %v1591
      %v1593 = vmul.f32 %v1557, %v1592
      %v1594 = vmul.f32 %v1558, %v1592
      %v1595 = vmul.f32 %v1559, %v1592
      %v1596 = vmul.f32 %v1560, %v1592
      %v1597 = vmul.f32 %v1561, %v1592
      %v1598 = vmul.f32 %v1562, %v1592
      %v1599 = vmul.f32 %v1563, %v1592
      %v1600 = vmul.f32 %v1564, %v1592
      %v1601 = vmul.f32 %v1565, %v1592
      %v1602 = vmul.f32 %v1566, %v1592
      %v1603 = vmul.f32 %v1567, %v1592
      %v1604 = vmul.f32 %v1568, %v1592
      %v1605 = vmul.f32 %v1569, %v1592
      %v1606 = vmul.f32 %v1570, %v1592
      %v1607 = vmul.f32 %v1571, %v1592
      %v1608 = vmul.f32 %v1572, %v1592
      %v1609 = vmul.f32 %v1573, %v1592
      %v1610 = vmul.f32 %v1574, %v1592
      %v1611 = vmul.f32 %v1575, %v1592
      %v1612 = vmul.f32 %v1576, %v1592
      %v1613 = vmul.f32 %v1577, %v1592
      %v1614 = vmul.f32 %v1578, %v1592
      %v1615 = vmul.f32 %v1579, %v1592
      %v1616 = vmul.f32 %v1580, %v1592
      %v1617 = vmul.f32 %v1581, %v1592
      %v1618 = vmul.f32 %v1582, %v1592
      %v1619 = vmul.f32 %v1583, %v1592
      %v1620 = vmul.f32 %v1584, %v1592
      %v1621 = vmul.f32 %v1585, %v1592
      %v1622 = vmul.f32 %v1586, %v1592
      %v1623 = vmul.f32 %v1587, %v1592
      %v1624 = vmul.f32 %v1588, %v1592
      %1625 = vst.msk [vmem:[%s224] sm:$0xff] %vm1477, %v1593
      %1626 = vst.msk [vmem:[%s224 + $0x8] sm:$0xff] %vm1477, %v1594
      %1627 = vst.msk [vmem:[%s224 + $0x10] sm:$0xff] %vm1477, %v1595
      %1628 = vst.msk [vmem:[%s224 + $0x18] sm:$0xff] %vm1477, %v1596
      %1629 = vst.msk [vmem:[%s224 + $0x20] sm:$0xff] %vm1477, %v1597
      %1630 = vst.msk [vmem:[%s224 + $0x28] sm:$0xff] %vm1477, %v1598
      %1631 = vst.msk [vmem:[%s224 + $0x30] sm:$0xff] %vm1477, %v1599
      %1632 = vst.msk [vmem:[%s224 + $0x38] sm:$0xff] %vm1477, %v1600
      %1633 = vst.msk [vmem:[%s224 + $0x40] sm:$0xff] %vm1477, %v1601
      %1634 = vst.msk [vmem:[%s224 + $0x48] sm:$0xff] %vm1477, %v1602
      %1635 = vst.msk [vmem:[%s224 + $0x50] sm:$0xff] %vm1477, %v1603
      %1636 = vst.msk [vmem:[%s224 + $0x58] sm:$0xff] %vm1477, %v1604
      %1637 = vst.msk [vmem:[%s224 + $0x60] sm:$0xff] %vm1477, %v1605
      %1638 = vst.msk [vmem:[%s224 + $0x68] sm:$0xff] %vm1477, %v1606
      %1639 = vst.msk [vmem:[%s224 + $0x70] sm:$0xff] %vm1477, %v1607
      %1640 = vst.msk [vmem:[%s224 + $0x78] sm:$0xff] %vm1477, %v1608
      %1641 = vst.msk [vmem:[%s224 + $0x80] sm:$0xff] %vm1477, %v1609
      %1642 = vst.msk [vmem:[%s224 + $0x88] sm:$0xff] %vm1477, %v1610
      %1643 = vst.msk [vmem:[%s224 + $0x90] sm:$0xff] %vm1477, %v1611
      %1644 = vst.msk [vmem:[%s224 + $0x98] sm:$0xff] %vm1477, %v1612
      %1645 = vst.msk [vmem:[%s224 + $0xa0] sm:$0xff] %vm1477, %v1613
      %1646 = vst.msk [vmem:[%s224 + $0xa8] sm:$0xff] %vm1477, %v1614
      %1647 = vst.msk [vmem:[%s224 + $0xb0] sm:$0xff] %vm1477, %v1615
      %1648 = vst.msk [vmem:[%s224 + $0xb8] sm:$0xff] %vm1477, %v1616
      %1649 = vst.msk [vmem:[%s224 + $0xc0] sm:$0xff] %vm1477, %v1617
      %1650 = vst.msk [vmem:[%s224 + $0xc8] sm:$0xff] %vm1477, %v1618
      %1651 = vst.msk [vmem:[%s224 + $0xd0] sm:$0xff] %vm1477, %v1619
      %1652 = vst.msk [vmem:[%s224 + $0xd8] sm:$0xff] %vm1477, %v1620
      %1653 = vst.msk [vmem:[%s224 + $0xe0] sm:$0xff] %vm1477, %v1621
      %1654 = vst.msk [vmem:[%s224 + $0xe8] sm:$0xff] %vm1477, %v1622
      %1655 = vst.msk [vmem:[%s224 + $0xf0] sm:$0xff] %vm1477, %v1623
      %1656 = vst.msk [vmem:[%s224 + $0xf8] sm:$0xff] %vm1477, %v1624
      %p1657 = scmp.lt.s32.totalorder %s16, 1
      %s1658 = scalar_select %p1657, %s16, 1
      %s1659 = smul.addr %s1658, 32
      %s1660 = smul.addr %s1659, 8
      %s1661 = scalar_lea.vmem %s5, %s1660
      // Predicated region
      $region48: #{attention_refinement_module.1} parent=39 // pred_check
        %p1662 = pneg %p144
      $region49: #{attention_refinement_module.1} parent=39 // pred_check_branch
        %1664 = sbr.rel (%p1662) target = $region51
      $region50: #{attention_refinement_module.1} parent=39 // pred_region
        _
      $region51: #{attention_refinement_module.1} parent=39 // pred_fallthru
        _
    $region40: #{attention_refinement_module.1} parent=5 // pred_fallthru
      _
    %p1665 = scmp.le.s32.totalorder 2, %s11
    // Predicated region
    $region52: #{attention_refinement_module.1} parent=5 // pred_check
      %p1666 = pneg %p1665
    $region53: #{attention_refinement_module.1} parent=5 // pred_check_branch
      %1668 = sbr.rel (%p1666) target = $region55
    $region54: #{attention_refinement_module.1} parent=5 // pred_region
      %s1669 = ssub.s32 %s11, 2
      // Predicated region
      $region56: #{attention_refinement_module.1} parent=54 // pred_check
        %p1670 = pneg %p150
      $region57: #{attention_refinement_module.1} parent=54 // pred_check_branch
        %1672 = sbr.rel (%p1670) target = $region59
      $region58: #{attention_refinement_module.1} parent=54 // pred_region
        %p1673 = scmp.lt.s32.totalorder %s17, 1
        %s1674 = scalar_select %p1673, %s17, 1
        %s1675 = smul.addr %s1674, 32
        %s1676 = smul.addr %s1675, 8
        %s1677 = scalar_lea.vmem %s5, %s1676
      $region59: #{attention_refinement_module.1} parent=54 // pred_fallthru
        _
    $region55: #{attention_refinement_module.1} parent=5 // pred_fallthru
      _
  $region6: #{attention_refinement_module.1} parent=0 // loop_footer
    %s15 = sadd.s32 1, %s11
  $region7: #{attention_refinement_module.1} parent=0 // loop_footer_branch
    %10 = sbr.rel target = $region3
  $region8: #{attention_refinement_module.1} parent=0 // loop_exit
    _

</llo_original>
